<compile_context>
chip_gen: v5e
topology: v5e:2x2
jax: 0.10.0
libtpu: 0.0.40
codegen_flags: <defaults>
</compile_context>

<pallas_src>
import math

import jax
import jax.numpy as jnp
from jax.experimental import pallas as pl
from jax.experimental.pallas import tpu as pltpu


# ------------------------------------------------------------------------------------------------
# Kernel: the whole ResidualCouplingBlock forward (reverse=False). Grid = (batch, flow).
# ------------------------------------------------------------------------------------------------
def _make_block_kernel(T, C, half, hidden, ksize, half_k, dilation_rate,
                       n_layers, n_flows, pad_align):

    def kernel(x_ref, m_ref, logs_ref, mask_ref,
               w_pre_ref, b_pre_ref,
               w_in_t_ref, b_in_t_ref, w_in_s_ref, b_in_s_ref,
               w_res_ref, b_res_ref, w_skip_ref, b_skip_ref,
               w_post_m_ref, b_post_m_ref, w_post_logs_ref, b_post_logs_ref,
               out_ref,
               xl_ref, ml_ref, ll_ref, h32_ref, hbf_ref, skip_ref):
        f = pl.program_id(1)
        mask = mask_ref[0]                                   # (T, 1) f32

        # --- flow 0 of this batch: stage both channel halves into persistent VMEM lanes and zero
        #     only the dilation pad rows of the bf16 tap buffer (they are never written again).
        @pl.when(f == 0)
        def _stage():
            xv, mv, lv = x_ref[0], m_ref[0], logs_ref[0]     # (T, C)
            xl_ref[0] = xv[:, :half]
            xl_ref[1] = xv[:, half:]
            ml_ref[0] = mv[:, :half]
            ml_ref[1] = mv[:, half:]
            ll_ref[0] = lv[:, :half]
            ll_ref[1] = lv[:, half:]
            if pad_align > 0:
                zpad = jnp.zeros((pad_align, hidden), jnp.bfloat16)
                hbf_ref[pl.ds(0, pad_align), :] = zpad
                hbf_ref[pl.ds(pad_align + T, pad_align), :] = zpad

        # --- the Flip between flows only swaps driver/target roles (channel reversal is pre-folded
        #     into this flow's weights), so the driver lane alternates 0,1,0,1,...  Vector selects
        #     keep every ref index static.
        is0 = (f % 2) == 0
        x0v, x1v = xl_ref[0], xl_ref[1]                      # (T, half) f32
        xd = jnp.where(is0, x0v, x1v)                        # driver half

        # pre Linear (gin_channels=0 -> no conditioning; p_dropout=0 -> dropout is identity)
        h0 = (jnp.dot(xd.astype(jnp.bfloat16), w_pre_ref[0],
                      preferred_element_type=jnp.float32) + b_pre_ref[0]) * mask
        h32_ref[...] = h0
        hbf_ref[pl.ds(pad_align, T), :] = h0.astype(jnp.bfloat16)   # single bf16 cast per layer

        # --- WN: static unroll over layers -> static dilations -> static, aligned-ish tap offsets.
        for l in range(n_layers):
            dil = dilation_rate ** l
            acc_t = None
            acc_s = None
            for j in range(ksize):                           # static unroll over taps
                start = pad_align + (j - half_k) * dil       # Python int
                tap = hbf_ref[pl.ds(start, T), :]            # bf16, no per-tap cast
                pt = jnp.dot(tap, w_in_t_ref[0, l, j], preferred_element_type=jnp.float32)
                ps = jnp.dot(tap, w_in_s_ref[0, l, j], preferred_element_type=jnp.float32)
                acc_t = pt if acc_t is None else acc_t + pt
                acc_s = ps if acc_s is None else acc_s + ps
            acts = jnp.tanh(acc_t + b_in_t_ref[0, l]) * jax.nn.sigmoid(acc_s + b_in_s_ref[0, l])
            acts_b = acts.astype(jnp.bfloat16)

            skip_c = (jnp.dot(acts_b, w_skip_ref[0, l], preferred_element_type=jnp.float32)
                      + b_skip_ref[0, l])
            if l == 0:
                skip_ref[...] = skip_c                       # no explicit zero-init store needed
            else:
                skip_ref[...] = skip_ref[...] + skip_c

            if l < n_layers - 1:                             # last WN layer has no residual branch
                res = (jnp.dot(acts_b, w_res_ref[0, l], preferred_element_type=jnp.float32)
                       + b_res_ref[0, l])
                h_new = (h32_ref[...] + res) * mask
                h32_ref[...] = h_new
                hbf_ref[pl.ds(pad_align, T), :] = h_new.astype(jnp.bfloat16)

        # --- post Linear + affine coupling on the target half.
        h_out = (skip_ref[...] * mask).astype(jnp.bfloat16)
        m_flow = (jnp.dot(h_out, w_post_m_ref[0], preferred_element_type=jnp.float32)
                  + b_post_m_ref[0]) * mask
        logs_flow = (jnp.dot(h_out, w_post_logs_ref[0], preferred_element_type=jnp.float32)
                     + b_post_logs_ref[0]) * mask
        scale = jnp.exp(logs_flow) * mask

        m0v, m1v = ml_ref[0], ml_ref[1]
        l0v, l1v = ll_ref[0], ll_ref[1]
        xt = jnp.where(is0, x1v, x0v)
        mt = jnp.where(is0, m1v, m0v)
        lt = jnp.where(is0, l1v, l0v)
        xt_n = m_flow + xt * scale
        mt_n = m_flow + mt * scale
        lt_n = lt + logs_flow                                # logs_flow already masked (ref-exact)
        xl_ref[0] = jnp.where(is0, x0v, xt_n)
        xl_ref[1] = jnp.where(is0, xt_n, x1v)
        ml_ref[0] = jnp.where(is0, m0v, mt_n)
        ml_ref[1] = jnp.where(is0, mt_n, m1v)
        ll_ref[0] = jnp.where(is0, l0v, lt_n)
        ll_ref[1] = jnp.where(is0, lt_n, l1v)

        # --- last flow: one fused lane-dense store. Relies on output-revisiting: the out block
        #     index is constant along the (innermost, "arbitrary") flow axis, so the HBM writeback
        #     only happens when the batch index advances / at the end of the grid.
        @pl.when(f == n_flows - 1)
        def _store():
            out_ref[0] = jnp.concatenate(
                [xl_ref[0], xl_ref[1], ml_ref[0], ml_ref[1], ll_ref[0], ll_ref[1]], axis=-1)

    return kernel


def residual_coupling_block_fused(x, m, logs, mask, w, dilation_rate, n_layers, ksize, n_flows):
    """x/m/logs: (B,T,C) f32, mask: (B,T,1) f32, w: per-flow-stacked weights.
    Returns (B, T, 3*C) = [x half0|half1, m half0|half1, logs half0|half1] (natural channel order)."""
    B, T, C = x.shape
    half = C // 2
    hidden = w["w_pre"].shape[-1]
    half_k = (ksize - 1) // 2
    pad = half_k * dilation_rate ** (n_layers - 1)
    pad_align = ((pad + 7) // 8) * 8 if pad > 0 else 0       # sublane-aligned live region

    kernel = _make_block_kernel(T, C, half, hidden, ksize, half_k, dilation_rate,
                                n_layers, n_flows, pad_align)

    io_spec = pl.BlockSpec((1, T, C), lambda b, f: (b, 0, 0))
    mask_spec = pl.BlockSpec((1, T, 1), lambda b, f: (b, 0, 0))
    out_spec = pl.BlockSpec((1, T, 3 * C), lambda b, f: (b, 0, 0))

    def flow_spec(arr):                                      # stream one flow's weights
        nd = arr.ndim
        return pl.BlockSpec((1,) + tuple(arr.shape[1:]),
                            lambda b, f: (f,) + (0,) * (nd - 1))

    weight_order = ["w_pre", "b_pre", "w_in_t", "b_in_t", "w_in_s", "b_in_s",
                    "w_res", "b_res", "w_skip", "b_skip",
                    "w_post_m", "b_post_m", "w_post_logs", "b_post_logs"]
    in_specs = [io_spec, io_spec, io_spec, mask_spec] + [flow_spec(w[k]) for k in weight_order]

    scratch_shapes = [
        pltpu.VMEM((2, T, half), jnp.float32),                  # x lanes (persist across flows)
        pltpu.VMEM((2, T, half), jnp.float32),                  # m lanes
        pltpu.VMEM((2, T, half), jnp.float32),                  # logs lanes
        pltpu.VMEM((T, hidden), jnp.float32),                   # f32 WN state h (live only)
        pltpu.VMEM((T + 2 * pad_align, hidden), jnp.bfloat16),  # zero-padded bf16 conv-tap buffer
        pltpu.VMEM((T, hidden), jnp.float32),                   # skip accumulator
    ]

    # Explicit VMEM budget (v7x has only 64 MiB physical): 2x-buffered blocks + scratch, 2x headroom.
    per_flow_w = sum(math.prod(w[k].shape[1:]) * w[k].dtype.itemsize for k in weight_order)
    act_blk = (3 * T * C + T + T * 3 * C) * 4
    scratch_b = (3 * 2 * T * half + 2 * T * hidden) * 4 + (T + 2 * pad_align) * hidden * 2
    vmem_limit = int(min(64 * 1024 * 1024,
                         max(32 * 1024 * 1024, 2 * (2 * (per_flow_w + act_blk) + scratch_b))))

    grid_spec = pltpu.PrefetchScalarGridSpec(
        num_scalar_prefetch=0,
        grid=(B, n_flows),                                   # flow axis MUST stay innermost
        in_specs=in_specs,
        out_specs=out_spec,
        scratch_shapes=scratch_shapes,
    )
    return pl.pallas_call(
        kernel,
        out_shape=jax.ShapeDtypeStruct((B, T, 3 * C), jnp.float32),
        grid_spec=grid_spec,
        compiler_params=pltpu.CompilerParams(
            dimension_semantics=("parallel", "arbitrary"),   # batch megacore-parallel, flows stateful
            vmem_limit_bytes=vmem_limit),
    )(x, m, logs, mask, *[w[k] for k in weight_order])


# ------------------------------------------------------------------------------------------------
# Weight prep: stack per-flow weights, fold Flip into w_pre rows / w_post columns, drop last-layer
# residual weights, cast matmul operands to bf16.
# ------------------------------------------------------------------------------------------------
def _stack_flow_weights(flow_params):
    n_layers = flow_params[0]["w_in_t"].shape[0]
    n_res = max(n_layers - 1, 1)
    bf = lambda a: a.astype(jnp.bfloat16)
    keys = ("w_pre", "b_pre", "w_in_t", "b_in_t", "w_in_s", "b_in_s",
            "w_res", "b_res", "w_skip", "b_skip",
            "w_post_m", "b_post_m", "w_post_logs", "b_post_logs")
    acc = {k: [] for k in keys}
    for f, p in enumerate(flow_params):
        flipped = (f % 2 == 1)                               # flow f sees flipped channel order
        w_pre = p["w_pre"][::-1, :] if flipped else p["w_pre"]
        w_pm = p["w_post_m"][:, ::-1] if flipped else p["w_post_m"]
        b_pm = p["b_post_m"][:, ::-1] if flipped else p["b_post_m"]
        w_pl = p["w_post_logs"][:, ::-1] if flipped else p["w_post_logs"]
        b_pl = p["b_post_logs"][:, ::-1] if flipped else p["b_post_logs"]
        acc["w_pre"].append(bf(w_pre));            acc["b_pre"].append(p["b_pre"])
        acc["w_in_t"].append(bf(p["w_in_t"]));     acc["b_in_t"].append(p["b_in_t"])
        acc["w_in_s"].append(bf(p["w_in_s"]));     acc["b_in_s"].append(p["b_in_s"])
        acc["w_res"].append(bf(p["w_res"][:n_res]))          # last WN layer: no residual branch
        acc["b_res"].append(p["b_res"][:n_res])
        acc["w_skip"].append(bf(p["w_skip"]));     acc["b_skip"].append(p["b_skip"])
        acc["w_post_m"].append(bf(w_pm));          acc["b_post_m"].append(b_pm)
        acc["w_post_logs"].append(bf(w_pl));       acc["b_post_logs"].append(b_pl)
    return {k: jnp.stack(v, axis=0) for k, v in acc.items()}


def residual_coupling_block_forward(x_bct, x_mask_b1t, m_bct, logs_bct, flow_params, dilation_rate):
    """Forward pass of ResidualCouplingBlock in PyTorch NCT layout: x/m/logs (B,C,T), mask (B,1,T)."""
    x = jnp.transpose(x_bct, (0, 2, 1))                      # channels-last for lane-dense matmuls
    m = jnp.transpose(m_bct, (0, 2, 1))
    logs = jnp.transpose(logs_bct, (0, 2, 1))
    mask = jnp.transpose(x_mask_b1t, (0, 2, 1))              # (B, T, 1)
    B, T, C = x.shape
    half = C // 2
    n_flows = len(flow_params)
    n_layers, ksize = flow_params[0]["w_in_t"].shape[0], flow_params[0]["w_in_t"].shape[1]

    w = _stack_flow_weights(flow_params)
    fused = residual_coupling_block_fused(x, m, logs, mask, w, dilation_rate,
                                          n_layers, ksize, n_flows)
    xo, mo, lo = fused[..., :C], fused[..., C:2 * C], fused[..., 2 * C:]
    if n_flows % 2 == 1:                                     # trailing Flip: [rev(half1), rev(half0)]
        def fix(a):
            return jnp.concatenate([jnp.flip(a[..., half:], -1), jnp.flip(a[..., :half], -1)], -1)
        xo, mo, lo = fix(xo), fix(mo), fix(lo)
    to_nct = lambda a: jnp.transpose(a, (0, 2, 1))
    return to_nct(xo), to_nct(mo), to_nct(lo)


# ------------------------------------------------------------------------------------------------
# Parameters (synthetic, matching the __init__ shapes) and a plain-JAX f32 reference.
# ------------------------------------------------------------------------------------------------
def init_coupling_params(key, half, hidden, ksize, n_layers):
    ks = jax.random.split(key, 14)
    n = jax.random.normal
    s_in = 1.0 / (hidden * ksize) ** 0.5
    s_rs = 1.0 / hidden ** 0.5
    # NOTE: torch zero-inits `post`; use small non-zero weights so the demo exercises the coupling.
    s_post = 0.1 / hidden ** 0.5
    w_res = s_rs * n(ks[6], (n_layers, hidden, hidden), jnp.float32)
    w_res = w_res.at[-1].set(0.0)                            # last WN layer has no residual branch
    return {
        "w_pre": n(ks[0], (half, hidden), jnp.float32) / half ** 0.5,
        "b_pre": 0.01 * n(ks[1], (1, hidden), jnp.float32),
        "w_in_t": s_in * n(ks[2], (n_layers, ksize, hidden, hidden), jnp.float32),
        "b_in_t": 0.01 * n(ks[3], (n_layers, 1, hidden), jnp.float32),
        "w_in_s": s_in * n(ks[4], (n_layers, ksize, hidden, hidden), jnp.float32),
        "b_in_s": 0.01 * n(ks[5], (n_layers, 1, hidden), jnp.float32),
        "w_res": w_res,
        "b_res": 0.01 * n(ks[7], (n_layers, 1, hidden), jnp.float32),
        "w_skip": s_rs * n(ks[8], (n_layers, hidden, hidden), jnp.float32),
        "b_skip": 0.01 * n(ks[9], (n_layers, 1, hidden), jnp.float32),
        "w_post_m": s_post * n(ks[10], (hidden, half), jnp.float32),
        "b_post_m": 0.01 * n(ks[11], (1, half), jnp.float32),
        "w_post_logs": s_post * n(ks[12], (hidden, half), jnp.float32),
        "b_post_logs": 0.01 * n(ks[13], (1, half), jnp.float32),
    }


def _shift_time(h, off):
    """Pure-JAX zero-padded time shift (reference only): y[:, t] = h[:, t + off]."""
    if off == 0:
        return h
    if off > 0:
        return jnp.concatenate([h[:, off:, :], jnp.zeros_like(h[:, :off, :])], axis=1)
    return jnp.concatenate([jnp.zeros_like(h[:, off:, :]), h[:, :off, :]], axis=1)


def _reference_block_forward(x_bct, x_mask_b1t, m_bct, logs_bct, flow_params, dilation_rate):
    """Plain-JAX f32 reference mirroring the PyTorch module (explicit concat + Flip)."""
    x = jnp.transpose(x_bct, (0, 2, 1))
    m = jnp.transpose(m_bct, (0, 2, 1))
    logs = jnp.transpose(logs_bct, (0, 2, 1))
    mask = jnp.transpose(x_mask_b1t, (0, 2, 1))
    half = x.shape[-1] // 2
    for p in flow_params:
        x0, x1 = x[..., :half], x[..., half:]
        m0, m1 = m[..., :half], m[..., half:]
        l0, l1 = logs[..., :half], logs[..., half:]
        n_layers, ksize = p["w_in_t"].shape[0], p["w_in_t"].shape[1]
        h = (x0 @ p["w_pre"] + p["b_pre"]) * mask
        skip = jnp.zeros_like(h)
        for i in range(n_layers):
            dil = dilation_rate ** i
            pad = (ksize - 1) // 2 * dil
            acc_t = jnp.zeros_like(h) + p["b_in_t"][i]
            acc_s = jnp.zeros_like(h) + p["b_in_s"][i]
            for j in range(ksize):
                tap = _shift_time(h, j * dil - pad)
                acc_t = acc_t + tap @ p["w_in_t"][i, j]
                acc_s = acc_s + tap @ p["w_in_s"][i, j]
            acts = jnp.tanh(acc_t) * jax.nn.sigmoid(acc_s)
            skip = skip + acts @ p["w_skip"][i] + p["b_skip"][i]
            if i < n_layers - 1:
                h = (h + acts @ p["w_res"][i] + p["b_res"][i]) * mask
        h_out = skip * mask
        m_flow = (h_out @ p["w_post_m"] + p["b_post_m"]) * mask
        logs_flow = (h_out @ p["w_post_logs"] + p["b_post_logs"]) * mask
        x1 = m_flow + x1 * jnp.exp(logs_flow) * mask
        m1 = m_flow + m1 * jnp.exp(logs_flow) * mask
        l1 = l1 + logs_flow
        x = jnp.flip(jnp.concatenate([x0, x1], -1), -1)
        m = jnp.flip(jnp.concatenate([m0, m1], -1), -1)
        logs = jnp.flip(jnp.concatenate([l0, l1], -1), -1)
    return (jnp.transpose(x, (0, 2, 1)),
            jnp.transpose(m, (0, 2, 1)),
            jnp.transpose(logs, (0, 2, 1)))


if __name__ == "__main__":
    # channels=8, hidden_channels=16, kernel_size=3, dilation_rate=2, n_layers=2, n_flows=4
    # NOTE: these tiny demo dims underfill the 128-lane vregs; tune/benchmark at production sizes.
    B, C, T = 2, 8, 16
    hidden, ksize, dilation_rate, n_layers, n_flows = 16, 3, 2, 2, 4

    key = jax.random.PRNGKey(0)
    kx, km, kl, kp = jax.random.split(key, 4)
    x = jax.random.normal(kx, (B, C, T), jnp.float32)
    m = jax.random.normal(km, (B, C, T), jnp.float32)
    logs = 0.1 * jax.random.normal(kl, (B, C, T), jnp.float32)

    lengths = jnp.array([T, T - 4])
    x_mask = (jnp.arange(T)[None, None, :] < lengths[:, None, None]).astype(jnp.float32)  # (B,1,T)

    flow_keys = jax.random.split(kp, n_flows)
    flow_params = [init_coupling_params(fk, C // 2, hidden, ksize, n_layers) for fk in flow_keys]

    fwd = jax.jit(lambda a, am, b, c, p:
                  residual_coupling_block_forward(a, am, b, c, p, dilation_rate))
    out_x, out_m, out_logs = fwd(x, x_mask, m, logs, flow_params)
    jax.block_until_ready((out_x, out_m, out_logs))

    assert out_x.shape == (B, C, T) and out_x.dtype == jnp.float32
    assert out_m.shape == (B, C, T)
    assert out_logs.shape == (B, C, T)

    # Self-check: fused Pallas block (bf16 matmuls, folded Flip) vs plain-JAX f32 reference.
    ref_x, ref_m, ref_logs = _reference_block_forward(x, x_mask, m, logs, flow_params, dilation_rate)
    for got, ref in ((out_x, ref_x), (out_m, ref_m), (out_logs, ref_logs)):
        err = float(jnp.max(jnp.abs(got - ref)))
        assert err < 1e-1, f"kernel vs reference mismatch: max abs err = {err}"

    print("KERNEL_OK")
</pallas_src>

<mosaic_0001>
module attributes {stable_mosaic.version = 11 : i64} {
  func.func @kernel(%arg0: i32, %arg1: i32, %arg2: memref<1x16x8xf32, #tpu.memory_space<vmem>>, %arg3: memref<1x16x8xf32, #tpu.memory_space<vmem>>, %arg4: memref<1x16x8xf32, #tpu.memory_space<vmem>>, %arg5: memref<1x16x1xf32, #tpu.memory_space<vmem>>, %arg6: memref<1x4x16xbf16, #tpu.memory_space<vmem>>, %arg7: memref<1x1x16xf32, #tpu.memory_space<vmem>>, %arg8: memref<1x2x3x16x16xbf16, #tpu.memory_space<vmem>>, %arg9: memref<1x2x1x16xf32, #tpu.memory_space<vmem>>, %arg10: memref<1x2x3x16x16xbf16, #tpu.memory_space<vmem>>, %arg11: memref<1x2x1x16xf32, #tpu.memory_space<vmem>>, %arg12: memref<1x1x16x16xbf16, #tpu.memory_space<vmem>>, %arg13: memref<1x1x1x16xf32, #tpu.memory_space<vmem>>, %arg14: memref<1x2x16x16xbf16, #tpu.memory_space<vmem>>, %arg15: memref<1x2x1x16xf32, #tpu.memory_space<vmem>>, %arg16: memref<1x16x4xbf16, #tpu.memory_space<vmem>>, %arg17: memref<1x1x4xf32, #tpu.memory_space<vmem>>, %arg18: memref<1x16x4xbf16, #tpu.memory_space<vmem>>, %arg19: memref<1x1x4xf32, #tpu.memory_space<vmem>>, %arg20: memref<1x16x24xf32, #tpu.memory_space<vmem>>, %arg21: memref<2x16x4xf32, #tpu.memory_space<vmem>>, %arg22: memref<2x16x4xf32, #tpu.memory_space<vmem>>, %arg23: memref<2x16x4xf32, #tpu.memory_space<vmem>>, %arg24: memref<16x16xf32, #tpu.memory_space<vmem>>, %arg25: memref<32x16xbf16, #tpu.memory_space<vmem>>, %arg26: memref<16x16xf32, #tpu.memory_space<vmem>>) attributes {dimension_semantics = [#tpu.dimension_semantics<parallel>, #tpu.dimension_semantics<arbitrary>], iteration_bounds = array<i64: 2, 4>, scalar_prefetch = 0 : i64, scratch_operands = 6 : i64, tpu.core_type = #tpu.core_type<tc>, window_params = [{transform_indices = @transform_0, window_bounds = array<i64: 1, 16, 8>}, {transform_indices = @transform_1, window_bounds = array<i64: 1, 16, 8>}, {transform_indices = @transform_2, window_bounds = array<i64: 1, 16, 8>}, {transform_indices = @transform_3, window_bounds = array<i64: 1, 16, 1>}, {transform_indices = @transform_4, window_bounds = array<i64: 1, 4, 16>}, {transform_indices = @transform_5, window_bounds = array<i64: 1, 1, 16>}, {transform_indices = @transform_6, window_bounds = array<i64: 1, 2, 3, 16, 16>}, {transform_indices = @transform_7, window_bounds = array<i64: 1, 2, 1, 16>}, {transform_indices = @transform_8, window_bounds = array<i64: 1, 2, 3, 16, 16>}, {transform_indices = @transform_9, window_bounds = array<i64: 1, 2, 1, 16>}, {transform_indices = @transform_10, window_bounds = array<i64: 1, 1, 16, 16>}, {transform_indices = @transform_11, window_bounds = array<i64: 1, 1, 1, 16>}, {transform_indices = @transform_12, window_bounds = array<i64: 1, 2, 16, 16>}, {transform_indices = @transform_13, window_bounds = array<i64: 1, 2, 1, 16>}, {transform_indices = @transform_14, window_bounds = array<i64: 1, 16, 4>}, {transform_indices = @transform_15, window_bounds = array<i64: 1, 1, 4>}, {transform_indices = @transform_16, window_bounds = array<i64: 1, 16, 4>}, {transform_indices = @transform_17, window_bounds = array<i64: 1, 1, 4>}, {transform_indices = @transform_18, window_bounds = array<i64: 1, 16, 24>}]} {
    %c0 = arith.constant 0 : index
    %c0_0 = arith.constant 0 : index
    %c0_1 = arith.constant 0 : index
    %0 = vector.load %arg5[%c0, %c0_0, %c0_1] : memref<1x16x1xf32, #tpu.memory_space<vmem>>, vector<1x16x1xf32>
    %1 = vector.shape_cast %0 : vector<1x16x1xf32> to vector<16x1xf32>
    %c0_i32 = arith.constant 0 : i32
    %2 = arith.cmpi eq, %arg1, %c0_i32 : i32
    %3 = arith.extui %2 : i1 to i32
    %c0_i32_2 = arith.constant 0 : i32
    %4 = arith.cmpi ne, %3, %c0_i32_2 : i32
    scf.if %4 {
      %c0_205 = arith.constant 0 : index
      %c0_206 = arith.constant 0 : index
      %c0_207 = arith.constant 0 : index
      %216 = vector.load %arg2[%c0_205, %c0_206, %c0_207] : memref<1x16x8xf32, #tpu.memory_space<vmem>>, vector<1x16x8xf32>
      %217 = vector.shape_cast %216 : vector<1x16x8xf32> to vector<16x8xf32>
      %c0_208 = arith.constant 0 : index
      %c0_209 = arith.constant 0 : index
      %c0_210 = arith.constant 0 : index
      %218 = vector.load %arg3[%c0_208, %c0_209, %c0_210] : memref<1x16x8xf32, #tpu.memory_space<vmem>>, vector<1x16x8xf32>
      %219 = vector.shape_cast %218 : vector<1x16x8xf32> to vector<16x8xf32>
      %c0_211 = arith.constant 0 : index
      %c0_212 = arith.constant 0 : index
      %c0_213 = arith.constant 0 : index
      %220 = vector.load %arg4[%c0_211, %c0_212, %c0_213] : memref<1x16x8xf32, #tpu.memory_space<vmem>>, vector<1x16x8xf32>
      %221 = vector.shape_cast %220 : vector<1x16x8xf32> to vector<16x8xf32>
      %222 = vector.extract_strided_slice %217 {offsets = [0, 0], sizes = [16, 4], strides = [1, 1]} : vector<16x8xf32> to vector<16x4xf32>
      %c0_214 = arith.constant 0 : index
      %c0_215 = arith.constant 0 : index
      %c0_216 = arith.constant 0 : index
      %223 = vector.load %arg21[%c0_214, %c0_215, %c0_216] : memref<2x16x4xf32, #tpu.memory_space<vmem>>, vector<1x16x4xf32>
      %224 = vector.shape_cast %223 : vector<1x16x4xf32> to vector<16x4xf32>
      %225 = vector.shape_cast %222 : vector<16x4xf32> to vector<1x16x4xf32>
      tpu.vector_store %arg21[%c0_214, %c0_215, %c0_216], %225 {strides = array<i32>} : memref<2x16x4xf32, #tpu.memory_space<vmem>>, vector<1x16x4xf32>,
      %226 = vector.extract_strided_slice %217 {offsets = [0, 4], sizes = [16, 4], strides = [1, 1]} : vector<16x8xf32> to vector<16x4xf32>
      %c1_217 = arith.constant 1 : index
      %c0_218 = arith.constant 0 : index
      %c0_219 = arith.constant 0 : index
      %227 = vector.load %arg21[%c1_217, %c0_218, %c0_219] : memref<2x16x4xf32, #tpu.memory_space<vmem>>, vector<1x16x4xf32>
      %228 = vector.shape_cast %227 : vector<1x16x4xf32> to vector<16x4xf32>
      %229 = vector.shape_cast %226 : vector<16x4xf32> to vector<1x16x4xf32>
      tpu.vector_store %arg21[%c1_217, %c0_218, %c0_219], %229 {strides = array<i32>} : memref<2x16x4xf32, #tpu.memory_space<vmem>>, vector<1x16x4xf32>,
      %230 = vector.extract_strided_slice %219 {offsets = [0, 0], sizes = [16, 4], strides = [1, 1]} : vector<16x8xf32> to vector<16x4xf32>
      %c0_220 = arith.constant 0 : index
      %c0_221 = arith.constant 0 : index
      %c0_222 = arith.constant 0 : index
      %231 = vector.load %arg22[%c0_220, %c0_221, %c0_222] : memref<2x16x4xf32, #tpu.memory_space<vmem>>, vector<1x16x4xf32>
      %232 = vector.shape_cast %231 : vector<1x16x4xf32> to vector<16x4xf32>
      %233 = vector.shape_cast %230 : vector<16x4xf32> to vector<1x16x4xf32>
      tpu.vector_store %arg22[%c0_220, %c0_221, %c0_222], %233 {strides = array<i32>} : memref<2x16x4xf32, #tpu.memory_space<vmem>>, vector<1x16x4xf32>,
      %234 = vector.extract_strided_slice %219 {offsets = [0, 4], sizes = [16, 4], strides = [1, 1]} : vector<16x8xf32> to vector<16x4xf32>
      %c1_223 = arith.constant 1 : index
      %c0_224 = arith.constant 0 : index
      %c0_225 = arith.constant 0 : index
      %235 = vector.load %arg22[%c1_223, %c0_224, %c0_225] : memref<2x16x4xf32, #tpu.memory_space<vmem>>, vector<1x16x4xf32>
      %236 = vector.shape_cast %235 : vector<1x16x4xf32> to vector<16x4xf32>
      %237 = vector.shape_cast %234 : vector<16x4xf32> to vector<1x16x4xf32>
      tpu.vector_store %arg22[%c1_223, %c0_224, %c0_225], %237 {strides = array<i32>} : memref<2x16x4xf32, #tpu.memory_space<vmem>>, vector<1x16x4xf32>,
      %238 = vector.extract_strided_slice %221 {offsets = [0, 0], sizes = [16, 4], strides = [1, 1]} : vector<16x8xf32> to vector<16x4xf32>
      %c0_226 = arith.constant 0 : index
      %c0_227 = arith.constant 0 : index
      %c0_228 = arith.constant 0 : index
      %239 = vector.load %arg23[%c0_226, %c0_227, %c0_228] : memref<2x16x4xf32, #tpu.memory_space<vmem>>, vector<1x16x4xf32>
      %240 = vector.shape_cast %239 : vector<1x16x4xf32> to vector<16x4xf32>
      %241 = vector.shape_cast %238 : vector<16x4xf32> to vector<1x16x4xf32>
      tpu.vector_store %arg23[%c0_226, %c0_227, %c0_228], %241 {strides = array<i32>} : memref<2x16x4xf32, #tpu.memory_space<vmem>>, vector<1x16x4xf32>,
      %242 = vector.extract_strided_slice %221 {offsets = [0, 4], sizes = [16, 4], strides = [1, 1]} : vector<16x8xf32> to vector<16x4xf32>
      %c1_229 = arith.constant 1 : index
      %c0_230 = arith.constant 0 : index
      %c0_231 = arith.constant 0 : index
      %243 = vector.load %arg23[%c1_229, %c0_230, %c0_231] : memref<2x16x4xf32, #tpu.memory_space<vmem>>, vector<1x16x4xf32>
      %244 = vector.shape_cast %243 : vector<1x16x4xf32> to vector<16x4xf32>
      %245 = vector.shape_cast %242 : vector<16x4xf32> to vector<1x16x4xf32>
      tpu.vector_store %arg23[%c1_229, %c0_230, %c0_231], %245 {strides = array<i32>} : memref<2x16x4xf32, #tpu.memory_space<vmem>>, vector<1x16x4xf32>,
      %cst_232 = arith.constant 0.000000e+00 : bf16
      %246 = vector.broadcast %cst_232 : bf16 to vector<8x16xbf16>
      %c0_233 = arith.constant 0 : index
      %c0_234 = arith.constant 0 : index
      %247 = vector.load %arg25[%c0_233, %c0_234] : memref<32x16xbf16, #tpu.memory_space<vmem>>, vector<8x16xbf16>
      tpu.vector_store %arg25[%c0_233, %c0_234], %246 {strides = array<i32>} : memref<32x16xbf16, #tpu.memory_space<vmem>>, vector<8x16xbf16>,
      %c24 = arith.constant 24 : index
      %c0_235 = arith.constant 0 : index
      %248 = vector.load %arg25[%c24, %c0_235] : memref<32x16xbf16, #tpu.memory_space<vmem>>, vector<8x16xbf16>
      tpu.vector_store %arg25[%c24, %c0_235], %246 {strides = array<i32>} : memref<32x16xbf16, #tpu.memory_space<vmem>>, vector<8x16xbf16>,
    } else {
    }
    %c2_i32 = arith.constant 2 : i32
    %c0_i32_3 = arith.constant 0 : i32
    %5 = arith.cmpi eq, %c2_i32, %c0_i32_3 : i32
    %c1_i32 = arith.constant 1 : i32
    %6 = arith.select %5, %c1_i32, %c2_i32 : i32
    %7 = arith.remsi %arg1, %6 : i32
    %c0_i32_4 = arith.constant 0 : i32
    %8 = arith.cmpi ne, %7, %c0_i32_4 : i32
    %c0_i32_5 = arith.constant 0 : i32
    %9 = arith.cmpi slt, %7, %c0_i32_5 : i32
    %c0_i32_6 = arith.constant 0 : i32
    %10 = arith.cmpi slt, %6, %c0_i32_6 : i32
    %11 = arith.xori %9, %10 : i1
    %12 = arith.andi %11, %8 : i1
    %13 = arith.addi %7, %6 : i32
    %14 = arith.select %12, %13, %7 : i32
    %c0_i32_7 = arith.constant 0 : i32
    %15 = arith.cmpi eq, %14, %c0_i32_7 : i32
    %c0_8 = arith.constant 0 : index
    %c0_9 = arith.constant 0 : index
    %c0_10 = arith.constant 0 : index
    %16 = vector.load %arg21[%c0_8, %c0_9, %c0_10] : memref<2x16x4xf32, #tpu.memory_space<vmem>>, vector<1x16x4xf32>
    %17 = vector.shape_cast %16 : vector<1x16x4xf32> to vector<16x4xf32>
    %c1 = arith.constant 1 : index
    %c0_11 = arith.constant 0 : index
    %c0_12 = arith.constant 0 : index
    %18 = vector.load %arg21[%c1, %c0_11, %c0_12] : memref<2x16x4xf32, #tpu.memory_space<vmem>>, vector<1x16x4xf32>
    %19 = vector.shape_cast %18 : vector<1x16x4xf32> to vector<16x4xf32>
    %20 = arith.select %15, %17, %19 : vector<16x4xf32>
    %21 = arith.truncf %20 : vector<16x4xf32> to vector<16x4xbf16>
    %c0_13 = arith.constant 0 : index
    %c0_14 = arith.constant 0 : index
    %c0_15 = arith.constant 0 : index
    %22 = vector.load %arg6[%c0_13, %c0_14, %c0_15] : memref<1x4x16xbf16, #tpu.memory_space<vmem>>, vector<1x4x16xbf16>
    %23 = vector.shape_cast %22 : vector<1x4x16xbf16> to vector<4x16xbf16>
    %cst = arith.constant dense<0.000000e+00> : vector<16x16xf32>
    %24 = tpu.matmul %21, %23, %cst {dimension_numbers = #tpu.dot_dimension_numbers<[1], [0], [0], [1], [0, 0, 1, 1], [], []>} : vector<16x4xbf16>, vector<4x16xbf16>, vector<16x16xf32> -> vector<16x16xf32>
    %c0_16 = arith.constant 0 : index
    %c0_17 = arith.constant 0 : index
    %c0_18 = arith.constant 0 : index
    %25 = vector.load %arg7[%c0_16, %c0_17, %c0_18] : memref<1x1x16xf32, #tpu.memory_space<vmem>>, vector<1x1x16xf32>
    %26 = vector.shape_cast %25 : vector<1x1x16xf32> to vector<1x16xf32>
    %27 = vector.broadcast %26 : vector<1x16xf32> to vector<16x16xf32>
    %28 = arith.addf %24, %27 : vector<16x16xf32>
    %29 = vector.broadcast %1 : vector<16x1xf32> to vector<16x16xf32>
    %30 = arith.mulf %28, %29 : vector<16x16xf32>
    %c0_19 = arith.constant 0 : index
    %c0_20 = arith.constant 0 : index
    %31 = vector.load %arg24[%c0_19, %c0_20] : memref<16x16xf32, #tpu.memory_space<vmem>>, vector<16x16xf32>
    tpu.vector_store %arg24[%c0_19, %c0_20], %30 {strides = array<i32>} : memref<16x16xf32, #tpu.memory_space<vmem>>, vector<16x16xf32>,
    %32 = arith.truncf %30 : vector<16x16xf32> to vector<16x16xbf16>
    %c8 = arith.constant 8 : index
    %c0_21 = arith.constant 0 : index
    %33 = vector.load %arg25[%c8, %c0_21] : memref<32x16xbf16, #tpu.memory_space<vmem>>, vector<16x16xbf16>
    tpu.vector_store %arg25[%c8, %c0_21], %32 {strides = array<i32>} : memref<32x16xbf16, #tpu.memory_space<vmem>>, vector<16x16xbf16>,
    %c7 = arith.constant 7 : index
    %c0_22 = arith.constant 0 : index
    %34 = vector.load %arg25[%c7, %c0_22] : memref<32x16xbf16, #tpu.memory_space<vmem>>, vector<16x16xbf16>
    %c0_23 = arith.constant 0 : index
    %c0_24 = arith.constant 0 : index
    %c0_25 = arith.constant 0 : index
    %c0_26 = arith.constant 0 : index
    %c0_27 = arith.constant 0 : index
    %35 = vector.load %arg8[%c0_23, %c0_24, %c0_25, %c0_26, %c0_27] : memref<1x2x3x16x16xbf16, #tpu.memory_space<vmem>>, vector<1x1x1x16x16xbf16>
    %36 = vector.shape_cast %35 : vector<1x1x1x16x16xbf16> to vector<16x16xbf16>
    %cst_28 = arith.constant dense<0.000000e+00> : vector<16x16xf32>
    %37 = tpu.matmul %34, %36, %cst_28 {dimension_numbers = #tpu.dot_dimension_numbers<[1], [0], [0], [1], [0, 0, 1, 1], [], []>} : vector<16x16xbf16>, vector<16x16xbf16>, vector<16x16xf32> -> vector<16x16xf32>
    %c0_29 = arith.constant 0 : index
    %c0_30 = arith.constant 0 : index
    %c0_31 = arith.constant 0 : index
    %c0_32 = arith.constant 0 : index
    %c0_33 = arith.constant 0 : index
    %38 = vector.load %arg10[%c0_29, %c0_30, %c0_31, %c0_32, %c0_33] : memref<1x2x3x16x16xbf16, #tpu.memory_space<vmem>>, vector<1x1x1x16x16xbf16>
    %39 = vector.shape_cast %38 : vector<1x1x1x16x16xbf16> to vector<16x16xbf16>
    %cst_34 = arith.constant dense<0.000000e+00> : vector<16x16xf32>
    %40 = tpu.matmul %34, %39, %cst_34 {dimension_numbers = #tpu.dot_dimension_numbers<[1], [0], [0], [1], [0, 0, 1, 1], [], []>} : vector<16x16xbf16>, vector<16x16xbf16>, vector<16x16xf32> -> vector<16x16xf32>
    %c8_35 = arith.constant 8 : index
    %c0_36 = arith.constant 0 : index
    %41 = vector.load %arg25[%c8_35, %c0_36] : memref<32x16xbf16, #tpu.memory_space<vmem>>, vector<16x16xbf16>
    %c0_37 = arith.constant 0 : index
    %c0_38 = arith.constant 0 : index
    %c1_39 = arith.constant 1 : index
    %c0_40 = arith.constant 0 : index
    %c0_41 = arith.constant 0 : index
    %42 = vector.load %arg8[%c0_37, %c0_38, %c1_39, %c0_40, %c0_41] : memref<1x2x3x16x16xbf16, #tpu.memory_space<vmem>>, vector<1x1x1x16x16xbf16>
    %43 = vector.shape_cast %42 : vector<1x1x1x16x16xbf16> to vector<16x16xbf16>
    %cst_42 = arith.constant dense<0.000000e+00> : vector<16x16xf32>
    %44 = tpu.matmul %41, %43, %cst_42 {dimension_numbers = #tpu.dot_dimension_numbers<[1], [0], [0], [1], [0, 0, 1, 1], [], []>} : vector<16x16xbf16>, vector<16x16xbf16>, vector<16x16xf32> -> vector<16x16xf32>
    %c0_43 = arith.constant 0 : index
    %c0_44 = arith.constant 0 : index
    %c1_45 = arith.constant 1 : index
    %c0_46 = arith.constant 0 : index
    %c0_47 = arith.constant 0 : index
    %45 = vector.load %arg10[%c0_43, %c0_44, %c1_45, %c0_46, %c0_47] : memref<1x2x3x16x16xbf16, #tpu.memory_space<vmem>>, vector<1x1x1x16x16xbf16>
    %46 = vector.shape_cast %45 : vector<1x1x1x16x16xbf16> to vector<16x16xbf16>
    %cst_48 = arith.constant dense<0.000000e+00> : vector<16x16xf32>
    %47 = tpu.matmul %41, %46, %cst_48 {dimension_numbers = #tpu.dot_dimension_numbers<[1], [0], [0], [1], [0, 0, 1, 1], [], []>} : vector<16x16xbf16>, vector<16x16xbf16>, vector<16x16xf32> -> vector<16x16xf32>
    %48 = arith.addf %37, %44 : vector<16x16xf32>
    %49 = arith.addf %40, %47 : vector<16x16xf32>
    %c9 = arith.constant 9 : index
    %c0_49 = arith.constant 0 : index
    %50 = vector.load %arg25[%c9, %c0_49] : memref<32x16xbf16, #tpu.memory_space<vmem>>, vector<16x16xbf16>
    %c0_50 = arith.constant 0 : index
    %c0_51 = arith.constant 0 : index
    %c2 = arith.constant 2 : index
    %c0_52 = arith.constant 0 : index
    %c0_53 = arith.constant 0 : index
    %51 = vector.load %arg8[%c0_50, %c0_51, %c2, %c0_52, %c0_53] : memref<1x2x3x16x16xbf16, #tpu.memory_space<vmem>>, vector<1x1x1x16x16xbf16>
    %52 = vector.shape_cast %51 : vector<1x1x1x16x16xbf16> to vector<16x16xbf16>
    %cst_54 = arith.constant dense<0.000000e+00> : vector<16x16xf32>
    %53 = tpu.matmul %50, %52, %cst_54 {dimension_numbers = #tpu.dot_dimension_numbers<[1], [0], [0], [1], [0, 0, 1, 1], [], []>} : vector<16x16xbf16>, vector<16x16xbf16>, vector<16x16xf32> -> vector<16x16xf32>
    %c0_55 = arith.constant 0 : index
    %c0_56 = arith.constant 0 : index
    %c2_57 = arith.constant 2 : index
    %c0_58 = arith.constant 0 : index
    %c0_59 = arith.constant 0 : index
    %54 = vector.load %arg10[%c0_55, %c0_56, %c2_57, %c0_58, %c0_59] : memref<1x2x3x16x16xbf16, #tpu.memory_space<vmem>>, vector<1x1x1x16x16xbf16>
    %55 = vector.shape_cast %54 : vector<1x1x1x16x16xbf16> to vector<16x16xbf16>
    %cst_60 = arith.constant dense<0.000000e+00> : vector<16x16xf32>
    %56 = tpu.matmul %50, %55, %cst_60 {dimension_numbers = #tpu.dot_dimension_numbers<[1], [0], [0], [1], [0, 0, 1, 1], [], []>} : vector<16x16xbf16>, vector<16x16xbf16>, vector<16x16xf32> -> vector<16x16xf32>
    %57 = arith.addf %48, %53 : vector<16x16xf32>
    %58 = arith.addf %49, %56 : vector<16x16xf32>
    %c0_61 = arith.constant 0 : index
    %c0_62 = arith.constant 0 : index
    %c0_63 = arith.constant 0 : index
    %c0_64 = arith.constant 0 : index
    %59 = vector.load %arg9[%c0_61, %c0_62, %c0_63, %c0_64] : memref<1x2x1x16xf32, #tpu.memory_space<vmem>>, vector<1x1x1x16xf32>
    %60 = vector.shape_cast %59 : vector<1x1x1x16xf32> to vector<1x16xf32>
    %61 = vector.broadcast %60 : vector<1x16xf32> to vector<16x16xf32>
    %62 = arith.addf %57, %61 : vector<16x16xf32>
    %63 = math.tanh %62 : vector<16x16xf32>
    %c0_65 = arith.constant 0 : index
    %c0_66 = arith.constant 0 : index
    %c0_67 = arith.constant 0 : index
    %c0_68 = arith.constant 0 : index
    %64 = vector.load %arg11[%c0_65, %c0_66, %c0_67, %c0_68] : memref<1x2x1x16xf32, #tpu.memory_space<vmem>>, vector<1x1x1x16xf32>
    %65 = vector.shape_cast %64 : vector<1x1x1x16xf32> to vector<1x16xf32>
    %66 = vector.broadcast %65 : vector<1x16xf32> to vector<16x16xf32>
    %67 = arith.addf %58, %66 : vector<16x16xf32>
    %68 = arith.negf %67 : vector<16x16xf32>
    %69 = math.exp %68 : vector<16x16xf32>
    %cst_69 = arith.constant 1.000000e+00 : f32
    %70 = vector.broadcast %cst_69 : f32 to vector<16x16xf32>
    %71 = arith.addf %70, %69 : vector<16x16xf32>
    %72 = arith.divf %70, %71 : vector<16x16xf32>
    %73 = arith.mulf %63, %72 : vector<16x16xf32>
    %74 = arith.truncf %73 : vector<16x16xf32> to vector<16x16xbf16>
    %c0_70 = arith.constant 0 : index
    %c0_71 = arith.constant 0 : index
    %c0_72 = arith.constant 0 : index
    %c0_73 = arith.constant 0 : index
    %75 = vector.load %arg14[%c0_70, %c0_71, %c0_72, %c0_73] : memref<1x2x16x16xbf16, #tpu.memory_space<vmem>>, vector<1x1x16x16xbf16>
    %76 = vector.shape_cast %75 : vector<1x1x16x16xbf16> to vector<16x16xbf16>
    %cst_74 = arith.constant dense<0.000000e+00> : vector<16x16xf32>
    %77 = tpu.matmul %74, %76, %cst_74 {dimension_numbers = #tpu.dot_dimension_numbers<[1], [0], [0], [1], [0, 0, 1, 1], [], []>} : vector<16x16xbf16>, vector<16x16xbf16>, vector<16x16xf32> -> vector<16x16xf32>
    %c0_75 = arith.constant 0 : index
    %c0_76 = arith.constant 0 : index
    %c0_77 = arith.constant 0 : index
    %c0_78 = arith.constant 0 : index
    %78 = vector.load %arg15[%c0_75, %c0_76, %c0_77, %c0_78] : memref<1x2x1x16xf32, #tpu.memory_space<vmem>>, vector<1x1x1x16xf32>
    %79 = vector.shape_cast %78 : vector<1x1x1x16xf32> to vector<1x16xf32>
    %80 = vector.broadcast %79 : vector<1x16xf32> to vector<16x16xf32>
    %81 = arith.addf %77, %80 : vector<16x16xf32>
    %c0_79 = arith.constant 0 : index
    %c0_80 = arith.constant 0 : index
    %82 = vector.load %arg26[%c0_79, %c0_80] : memref<16x16xf32, #tpu.memory_space<vmem>>, vector<16x16xf32>
    tpu.vector_store %arg26[%c0_79, %c0_80], %81 {strides = array<i32>} : memref<16x16xf32, #tpu.memory_space<vmem>>, vector<16x16xf32>,
    %c0_81 = arith.constant 0 : index
    %c0_82 = arith.constant 0 : index
    %c0_83 = arith.constant 0 : index
    %c0_84 = arith.constant 0 : index
    %83 = vector.load %arg12[%c0_81, %c0_82, %c0_83, %c0_84] : memref<1x1x16x16xbf16, #tpu.memory_space<vmem>>, vector<1x1x16x16xbf16>
    %84 = vector.shape_cast %83 : vector<1x1x16x16xbf16> to vector<16x16xbf16>
    %cst_85 = arith.constant dense<0.000000e+00> : vector<16x16xf32>
    %85 = tpu.matmul %74, %84, %cst_85 {dimension_numbers = #tpu.dot_dimension_numbers<[1], [0], [0], [1], [0, 0, 1, 1], [], []>} : vector<16x16xbf16>, vector<16x16xbf16>, vector<16x16xf32> -> vector<16x16xf32>
    %c0_86 = arith.constant 0 : index
    %c0_87 = arith.constant 0 : index
    %c0_88 = arith.constant 0 : index
    %c0_89 = arith.constant 0 : index
    %86 = vector.load %arg13[%c0_86, %c0_87, %c0_88, %c0_89] : memref<1x1x1x16xf32, #tpu.memory_space<vmem>>, vector<1x1x1x16xf32>
    %87 = vector.shape_cast %86 : vector<1x1x1x16xf32> to vector<1x16xf32>
    %88 = vector.broadcast %87 : vector<1x16xf32> to vector<16x16xf32>
    %89 = arith.addf %85, %88 : vector<16x16xf32>
    %c0_90 = arith.constant 0 : index
    %c0_91 = arith.constant 0 : index
    %90 = vector.load %arg24[%c0_90, %c0_91] : memref<16x16xf32, #tpu.memory_space<vmem>>, vector<16x16xf32>
    %91 = arith.addf %90, %89 : vector<16x16xf32>
    %92 = vector.broadcast %1 : vector<16x1xf32> to vector<16x16xf32>
    %93 = arith.mulf %91, %92 : vector<16x16xf32>
    %c0_92 = arith.constant 0 : index
    %c0_93 = arith.constant 0 : index
    %94 = vector.load %arg24[%c0_92, %c0_93] : memref<16x16xf32, #tpu.memory_space<vmem>>, vector<16x16xf32>
    tpu.vector_store %arg24[%c0_92, %c0_93], %93 {strides = array<i32>} : memref<16x16xf32, #tpu.memory_space<vmem>>, vector<16x16xf32>,
    %95 = arith.truncf %93 : vector<16x16xf32> to vector<16x16xbf16>
    %c8_94 = arith.constant 8 : index
    %c0_95 = arith.constant 0 : index
    %96 = vector.load %arg25[%c8_94, %c0_95] : memref<32x16xbf16, #tpu.memory_space<vmem>>, vector<16x16xbf16>
    tpu.vector_store %arg25[%c8_94, %c0_95], %95 {strides = array<i32>} : memref<32x16xbf16, #tpu.memory_space<vmem>>, vector<16x16xbf16>,
    %c6 = arith.constant 6 : index
    %c0_96 = arith.constant 0 : index
    %97 = vector.load %arg25[%c6, %c0_96] : memref<32x16xbf16, #tpu.memory_space<vmem>>, vector<16x16xbf16>
    %c0_97 = arith.constant 0 : index
    %c1_98 = arith.constant 1 : index
    %c0_99 = arith.constant 0 : index
    %c0_100 = arith.constant 0 : index
    %c0_101 = arith.constant 0 : index
    %98 = vector.load %arg8[%c0_97, %c1_98, %c0_99, %c0_100, %c0_101] : memref<1x2x3x16x16xbf16, #tpu.memory_space<vmem>>, vector<1x1x1x16x16xbf16>
    %99 = vector.shape_cast %98 : vector<1x1x1x16x16xbf16> to vector<16x16xbf16>
    %cst_102 = arith.constant dense<0.000000e+00> : vector<16x16xf32>
    %100 = tpu.matmul %97, %99, %cst_102 {dimension_numbers = #tpu.dot_dimension_numbers<[1], [0], [0], [1], [0, 0, 1, 1], [], []>} : vector<16x16xbf16>, vector<16x16xbf16>, vector<16x16xf32> -> vector<16x16xf32>
    %c0_103 = arith.constant 0 : index
    %c1_104 = arith.constant 1 : index
    %c0_105 = arith.constant 0 : index
    %c0_106 = arith.constant 0 : index
    %c0_107 = arith.constant 0 : index
    %101 = vector.load %arg10[%c0_103, %c1_104, %c0_105, %c0_106, %c0_107] : memref<1x2x3x16x16xbf16, #tpu.memory_space<vmem>>, vector<1x1x1x16x16xbf16>
    %102 = vector.shape_cast %101 : vector<1x1x1x16x16xbf16> to vector<16x16xbf16>
    %cst_108 = arith.constant dense<0.000000e+00> : vector<16x16xf32>
    %103 = tpu.matmul %97, %102, %cst_108 {dimension_numbers = #tpu.dot_dimension_numbers<[1], [0], [0], [1], [0, 0, 1, 1], [], []>} : vector<16x16xbf16>, vector<16x16xbf16>, vector<16x16xf32> -> vector<16x16xf32>
    %c8_109 = arith.constant 8 : index
    %c0_110 = arith.constant 0 : index
    %104 = vector.load %arg25[%c8_109, %c0_110] : memref<32x16xbf16, #tpu.memory_space<vmem>>, vector<16x16xbf16>
    %c0_111 = arith.constant 0 : index
    %c1_112 = arith.constant 1 : index
    %c1_113 = arith.constant 1 : index
    %c0_114 = arith.constant 0 : index
    %c0_115 = arith.constant 0 : index
    %105 = vector.load %arg8[%c0_111, %c1_112, %c1_113, %c0_114, %c0_115] : memref<1x2x3x16x16xbf16, #tpu.memory_space<vmem>>, vector<1x1x1x16x16xbf16>
    %106 = vector.shape_cast %105 : vector<1x1x1x16x16xbf16> to vector<16x16xbf16>
    %cst_116 = arith.constant dense<0.000000e+00> : vector<16x16xf32>
    %107 = tpu.matmul %104, %106, %cst_116 {dimension_numbers = #tpu.dot_dimension_numbers<[1], [0], [0], [1], [0, 0, 1, 1], [], []>} : vector<16x16xbf16>, vector<16x16xbf16>, vector<16x16xf32> -> vector<16x16xf32>
    %c0_117 = arith.constant 0 : index
    %c1_118 = arith.constant 1 : index
    %c1_119 = arith.constant 1 : index
    %c0_120 = arith.constant 0 : index
    %c0_121 = arith.constant 0 : index
    %108 = vector.load %arg10[%c0_117, %c1_118, %c1_119, %c0_120, %c0_121] : memref<1x2x3x16x16xbf16, #tpu.memory_space<vmem>>, vector<1x1x1x16x16xbf16>
    %109 = vector.shape_cast %108 : vector<1x1x1x16x16xbf16> to vector<16x16xbf16>
    %cst_122 = arith.constant dense<0.000000e+00> : vector<16x16xf32>
    %110 = tpu.matmul %104, %109, %cst_122 {dimension_numbers = #tpu.dot_dimension_numbers<[1], [0], [0], [1], [0, 0, 1, 1], [], []>} : vector<16x16xbf16>, vector<16x16xbf16>, vector<16x16xf32> -> vector<16x16xf32>
    %111 = arith.addf %100, %107 : vector<16x16xf32>
    %112 = arith.addf %103, %110 : vector<16x16xf32>
    %c10 = arith.constant 10 : index
    %c0_123 = arith.constant 0 : index
    %113 = vector.load %arg25[%c10, %c0_123] : memref<32x16xbf16, #tpu.memory_space<vmem>>, vector<16x16xbf16>
    %c0_124 = arith.constant 0 : index
    %c1_125 = arith.constant 1 : index
    %c2_126 = arith.constant 2 : index
    %c0_127 = arith.constant 0 : index
    %c0_128 = arith.constant 0 : index
    %114 = vector.load %arg8[%c0_124, %c1_125, %c2_126, %c0_127, %c0_128] : memref<1x2x3x16x16xbf16, #tpu.memory_space<vmem>>, vector<1x1x1x16x16xbf16>
    %115 = vector.shape_cast %114 : vector<1x1x1x16x16xbf16> to vector<16x16xbf16>
    %cst_129 = arith.constant dense<0.000000e+00> : vector<16x16xf32>
    %116 = tpu.matmul %113, %115, %cst_129 {dimension_numbers = #tpu.dot_dimension_numbers<[1], [0], [0], [1], [0, 0, 1, 1], [], []>} : vector<16x16xbf16>, vector<16x16xbf16>, vector<16x16xf32> -> vector<16x16xf32>
    %c0_130 = arith.constant 0 : index
    %c1_131 = arith.constant 1 : index
    %c2_132 = arith.constant 2 : index
    %c0_133 = arith.constant 0 : index
    %c0_134 = arith.constant 0 : index
    %117 = vector.load %arg10[%c0_130, %c1_131, %c2_132, %c0_133, %c0_134] : memref<1x2x3x16x16xbf16, #tpu.memory_space<vmem>>, vector<1x1x1x16x16xbf16>
    %118 = vector.shape_cast %117 : vector<1x1x1x16x16xbf16> to vector<16x16xbf16>
    %cst_135 = arith.constant dense<0.000000e+00> : vector<16x16xf32>
    %119 = tpu.matmul %113, %118, %cst_135 {dimension_numbers = #tpu.dot_dimension_numbers<[1], [0], [0], [1], [0, 0, 1, 1], [], []>} : vector<16x16xbf16>, vector<16x16xbf16>, vector<16x16xf32> -> vector<16x16xf32>
    %120 = arith.addf %111, %116 : vector<16x16xf32>
    %121 = arith.addf %112, %119 : vector<16x16xf32>
    %c0_136 = arith.constant 0 : index
    %c1_137 = arith.constant 1 : index
    %c0_138 = arith.constant 0 : index
    %c0_139 = arith.constant 0 : index
    %122 = vector.load %arg9[%c0_136, %c1_137, %c0_138, %c0_139] : memref<1x2x1x16xf32, #tpu.memory_space<vmem>>, vector<1x1x1x16xf32>
    %123 = vector.shape_cast %122 : vector<1x1x1x16xf32> to vector<1x16xf32>
    %124 = vector.broadcast %123 : vector<1x16xf32> to vector<16x16xf32>
    %125 = arith.addf %120, %124 : vector<16x16xf32>
    %126 = math.tanh %125 : vector<16x16xf32>
    %c0_140 = arith.constant 0 : index
    %c1_141 = arith.constant 1 : index
    %c0_142 = arith.constant 0 : index
    %c0_143 = arith.constant 0 : index
    %127 = vector.load %arg11[%c0_140, %c1_141, %c0_142, %c0_143] : memref<1x2x1x16xf32, #tpu.memory_space<vmem>>, vector<1x1x1x16xf32>
    %128 = vector.shape_cast %127 : vector<1x1x1x16xf32> to vector<1x16xf32>
    %129 = vector.broadcast %128 : vector<1x16xf32> to vector<16x16xf32>
    %130 = arith.addf %121, %129 : vector<16x16xf32>
    %131 = arith.negf %130 : vector<16x16xf32>
    %132 = math.exp %131 : vector<16x16xf32>
    %cst_144 = arith.constant 1.000000e+00 : f32
    %133 = vector.broadcast %cst_144 : f32 to vector<16x16xf32>
    %134 = arith.addf %133, %132 : vector<16x16xf32>
    %135 = arith.divf %133, %134 : vector<16x16xf32>
    %136 = arith.mulf %126, %135 : vector<16x16xf32>
    %137 = arith.truncf %136 : vector<16x16xf32> to vector<16x16xbf16>
    %c0_145 = arith.constant 0 : index
    %c1_146 = arith.constant 1 : index
    %c0_147 = arith.constant 0 : index
    %c0_148 = arith.constant 0 : index
    %138 = vector.load %arg14[%c0_145, %c1_146, %c0_147, %c0_148] : memref<1x2x16x16xbf16, #tpu.memory_space<vmem>>, vector<1x1x16x16xbf16>
    %139 = vector.shape_cast %138 : vector<1x1x16x16xbf16> to vector<16x16xbf16>
    %cst_149 = arith.constant dense<0.000000e+00> : vector<16x16xf32>
    %140 = tpu.matmul %137, %139, %cst_149 {dimension_numbers = #tpu.dot_dimension_numbers<[1], [0], [0], [1], [0, 0, 1, 1], [], []>} : vector<16x16xbf16>, vector<16x16xbf16>, vector<16x16xf32> -> vector<16x16xf32>
    %c0_150 = arith.constant 0 : index
    %c1_151 = arith.constant 1 : index
    %c0_152 = arith.constant 0 : index
    %c0_153 = arith.constant 0 : index
    %141 = vector.load %arg15[%c0_150, %c1_151, %c0_152, %c0_153] : memref<1x2x1x16xf32, #tpu.memory_space<vmem>>, vector<1x1x1x16xf32>
    %142 = vector.shape_cast %141 : vector<1x1x1x16xf32> to vector<1x16xf32>
    %143 = vector.broadcast %142 : vector<1x16xf32> to vector<16x16xf32>
    %144 = arith.addf %140, %143 : vector<16x16xf32>
    %c0_154 = arith.constant 0 : index
    %c0_155 = arith.constant 0 : index
    %145 = vector.load %arg26[%c0_154, %c0_155] : memref<16x16xf32, #tpu.memory_space<vmem>>, vector<16x16xf32>
    %146 = arith.addf %145, %144 : vector<16x16xf32>
    %c0_156 = arith.constant 0 : index
    %c0_157 = arith.constant 0 : index
    %147 = vector.load %arg26[%c0_156, %c0_157] : memref<16x16xf32, #tpu.memory_space<vmem>>, vector<16x16xf32>
    tpu.vector_store %arg26[%c0_156, %c0_157], %146 {strides = array<i32>} : memref<16x16xf32, #tpu.memory_space<vmem>>, vector<16x16xf32>,
    %c0_158 = arith.constant 0 : index
    %c0_159 = arith.constant 0 : index
    %148 = vector.load %arg26[%c0_158, %c0_159] : memref<16x16xf32, #tpu.memory_space<vmem>>, vector<16x16xf32>
    %149 = vector.broadcast %1 : vector<16x1xf32> to vector<16x16xf32>
    %150 = arith.mulf %148, %149 : vector<16x16xf32>
    %151 = arith.truncf %150 : vector<16x16xf32> to vector<16x16xbf16>
    %c0_160 = arith.constant 0 : index
    %c0_161 = arith.constant 0 : index
    %c0_162 = arith.constant 0 : index
    %152 = vector.load %arg16[%c0_160, %c0_161, %c0_162] : memref<1x16x4xbf16, #tpu.memory_space<vmem>>, vector<1x16x4xbf16>
    %153 = vector.shape_cast %152 : vector<1x16x4xbf16> to vector<16x4xbf16>
    %cst_163 = arith.constant dense<0.000000e+00> : vector<16x4xf32>
    %154 = tpu.matmul %151, %153, %cst_163 {dimension_numbers = #tpu.dot_dimension_numbers<[1], [0], [0], [1], [0, 0, 1, 1], [], []>} : vector<16x16xbf16>, vector<16x4xbf16>, vector<16x4xf32> -> vector<16x4xf32>
    %c0_164 = arith.constant 0 : index
    %c0_165 = arith.constant 0 : index
    %c0_166 = arith.constant 0 : index
    %155 = vector.load %arg17[%c0_164, %c0_165, %c0_166] : memref<1x1x4xf32, #tpu.memory_space<vmem>>, vector<1x1x4xf32>
    %156 = vector.shape_cast %155 : vector<1x1x4xf32> to vector<1x4xf32>
    %157 = vector.broadcast %156 : vector<1x4xf32> to vector<16x4xf32>
    %158 = arith.addf %154, %157 : vector<16x4xf32>
    %159 = vector.broadcast %1 : vector<16x1xf32> to vector<16x4xf32>
    %160 = arith.mulf %158, %159 : vector<16x4xf32>
    %c0_167 = arith.constant 0 : index
    %c0_168 = arith.constant 0 : index
    %c0_169 = arith.constant 0 : index
    %161 = vector.load %arg18[%c0_167, %c0_168, %c0_169] : memref<1x16x4xbf16, #tpu.memory_space<vmem>>, vector<1x16x4xbf16>
    %162 = vector.shape_cast %161 : vector<1x16x4xbf16> to vector<16x4xbf16>
    %cst_170 = arith.constant dense<0.000000e+00> : vector<16x4xf32>
    %163 = tpu.matmul %151, %162, %cst_170 {dimension_numbers = #tpu.dot_dimension_numbers<[1], [0], [0], [1], [0, 0, 1, 1], [], []>} : vector<16x16xbf16>, vector<16x4xbf16>, vector<16x4xf32> -> vector<16x4xf32>
    %c0_171 = arith.constant 0 : index
    %c0_172 = arith.constant 0 : index
    %c0_173 = arith.constant 0 : index
    %164 = vector.load %arg19[%c0_171, %c0_172, %c0_173] : memref<1x1x4xf32, #tpu.memory_space<vmem>>, vector<1x1x4xf32>
    %165 = vector.shape_cast %164 : vector<1x1x4xf32> to vector<1x4xf32>
    %166 = vector.broadcast %165 : vector<1x4xf32> to vector<16x4xf32>
    %167 = arith.addf %163, %166 : vector<16x4xf32>
    %168 = vector.broadcast %1 : vector<16x1xf32> to vector<16x4xf32>
    %169 = arith.mulf %167, %168 : vector<16x4xf32>
    %170 = math.exp %169 : vector<16x4xf32>
    %171 = vector.broadcast %1 : vector<16x1xf32> to vector<16x4xf32>
    %172 = arith.mulf %170, %171 : vector<16x4xf32>
    %c0_174 = arith.constant 0 : index
    %c0_175 = arith.constant 0 : index
    %c0_176 = arith.constant 0 : index
    %173 = vector.load %arg22[%c0_174, %c0_175, %c0_176] : memref<2x16x4xf32, #tpu.memory_space<vmem>>, vector<1x16x4xf32>
    %174 = vector.shape_cast %173 : vector<1x16x4xf32> to vector<16x4xf32>
    %c1_177 = arith.constant 1 : index
    %c0_178 = arith.constant 0 : index
    %c0_179 = arith.constant 0 : index
    %175 = vector.load %arg22[%c1_177, %c0_178, %c0_179] : memref<2x16x4xf32, #tpu.memory_space<vmem>>, vector<1x16x4xf32>
    %176 = vector.shape_cast %175 : vector<1x16x4xf32> to vector<16x4xf32>
    %c0_180 = arith.constant 0 : index
    %c0_181 = arith.constant 0 : index
    %c0_182 = arith.constant 0 : index
    %177 = vector.load %arg23[%c0_180, %c0_181, %c0_182] : memref<2x16x4xf32, #tpu.memory_space<vmem>>, vector<1x16x4xf32>
    %178 = vector.shape_cast %177 : vector<1x16x4xf32> to vector<16x4xf32>
    %c1_183 = arith.constant 1 : index
    %c0_184 = arith.constant 0 : index
    %c0_185 = arith.constant 0 : index
    %179 = vector.load %arg23[%c1_183, %c0_184, %c0_185] : memref<2x16x4xf32, #tpu.memory_space<vmem>>, vector<1x16x4xf32>
    %180 = vector.shape_cast %179 : vector<1x16x4xf32> to vector<16x4xf32>
    %181 = arith.select %15, %19, %17 : vector<16x4xf32>
    %182 = arith.select %15, %176, %174 : vector<16x4xf32>
    %183 = arith.select %15, %180, %178 : vector<16x4xf32>
    %184 = arith.mulf %181, %172 : vector<16x4xf32>
    %185 = arith.addf %160, %184 : vector<16x4xf32>
    %186 = arith.mulf %182, %172 : vector<16x4xf32>
    %187 = arith.addf %160, %186 : vector<16x4xf32>
    %188 = arith.addf %183, %169 : vector<16x4xf32>
    %189 = arith.select %15, %17, %185 : vector<16x4xf32>
    %c0_186 = arith.constant 0 : index
    %c0_187 = arith.constant 0 : index
    %c0_188 = arith.constant 0 : index
    %190 = vector.load %arg21[%c0_186, %c0_187, %c0_188] : memref<2x16x4xf32, #tpu.memory_space<vmem>>, vector<1x16x4xf32>
    %191 = vector.shape_cast %190 : vector<1x16x4xf32> to vector<16x4xf32>
    %192 = vector.shape_cast %189 : vector<16x4xf32> to vector<1x16x4xf32>
    tpu.vector_store %arg21[%c0_186, %c0_187, %c0_188], %192 {strides = array<i32>} : memref<2x16x4xf32, #tpu.memory_space<vmem>>, vector<1x16x4xf32>,
    %193 = arith.select %15, %185, %19 : vector<16x4xf32>
    %c1_189 = arith.constant 1 : index
    %c0_190 = arith.constant 0 : index
    %c0_191 = arith.constant 0 : index
    %194 = vector.load %arg21[%c1_189, %c0_190, %c0_191] : memref<2x16x4xf32, #tpu.memory_space<vmem>>, vector<1x16x4xf32>
    %195 = vector.shape_cast %194 : vector<1x16x4xf32> to vector<16x4xf32>
    %196 = vector.shape_cast %193 : vector<16x4xf32> to vector<1x16x4xf32>
    tpu.vector_store %arg21[%c1_189, %c0_190, %c0_191], %196 {strides = array<i32>} : memref<2x16x4xf32, #tpu.memory_space<vmem>>, vector<1x16x4xf32>,
    %197 = arith.select %15, %174, %187 : vector<16x4xf32>
    %c0_192 = arith.constant 0 : index
    %c0_193 = arith.constant 0 : index
    %c0_194 = arith.constant 0 : index
    %198 = vector.load %arg22[%c0_192, %c0_193, %c0_194] : memref<2x16x4xf32, #tpu.memory_space<vmem>>, vector<1x16x4xf32>
    %199 = vector.shape_cast %198 : vector<1x16x4xf32> to vector<16x4xf32>
    %200 = vector.shape_cast %197 : vector<16x4xf32> to vector<1x16x4xf32>
    tpu.vector_store %arg22[%c0_192, %c0_193, %c0_194], %200 {strides = array<i32>} : memref<2x16x4xf32, #tpu.memory_space<vmem>>, vector<1x16x4xf32>,
    %201 = arith.select %15, %187, %176 : vector<16x4xf32>
    %c1_195 = arith.constant 1 : index
    %c0_196 = arith.constant 0 : index
    %c0_197 = arith.constant 0 : index
    %202 = vector.load %arg22[%c1_195, %c0_196, %c0_197] : memref<2x16x4xf32, #tpu.memory_space<vmem>>, vector<1x16x4xf32>
    %203 = vector.shape_cast %202 : vector<1x16x4xf32> to vector<16x4xf32>
    %204 = vector.shape_cast %201 : vector<16x4xf32> to vector<1x16x4xf32>
    tpu.vector_store %arg22[%c1_195, %c0_196, %c0_197], %204 {strides = array<i32>} : memref<2x16x4xf32, #tpu.memory_space<vmem>>, vector<1x16x4xf32>,
    %205 = arith.select %15, %178, %188 : vector<16x4xf32>
    %c0_198 = arith.constant 0 : index
    %c0_199 = arith.constant 0 : index
    %c0_200 = arith.constant 0 : index
    %206 = vector.load %arg23[%c0_198, %c0_199, %c0_200] : memref<2x16x4xf32, #tpu.memory_space<vmem>>, vector<1x16x4xf32>
    %207 = vector.shape_cast %206 : vector<1x16x4xf32> to vector<16x4xf32>
    %208 = vector.shape_cast %205 : vector<16x4xf32> to vector<1x16x4xf32>
    tpu.vector_store %arg23[%c0_198, %c0_199, %c0_200], %208 {strides = array<i32>} : memref<2x16x4xf32, #tpu.memory_space<vmem>>, vector<1x16x4xf32>,
    %209 = arith.select %15, %188, %180 : vector<16x4xf32>
    %c1_201 = arith.constant 1 : index
    %c0_202 = arith.constant 0 : index
    %c0_203 = arith.constant 0 : index
    %210 = vector.load %arg23[%c1_201, %c0_202, %c0_203] : memref<2x16x4xf32, #tpu.memory_space<vmem>>, vector<1x16x4xf32>
    %211 = vector.shape_cast %210 : vector<1x16x4xf32> to vector<16x4xf32>
    %212 = vector.shape_cast %209 : vector<16x4xf32> to vector<1x16x4xf32>
    tpu.vector_store %arg23[%c1_201, %c0_202, %c0_203], %212 {strides = array<i32>} : memref<2x16x4xf32, #tpu.memory_space<vmem>>, vector<1x16x4xf32>,
    %c3_i32 = arith.constant 3 : i32
    %213 = arith.cmpi eq, %arg1, %c3_i32 : i32
    %214 = arith.extui %213 : i1 to i32
    %c0_i32_204 = arith.constant 0 : i32
    %215 = arith.cmpi ne, %214, %c0_i32_204 : i32
    scf.if %215 {
      %c0_205 = arith.constant 0 : index
      %c0_206 = arith.constant 0 : index
      %c0_207 = arith.constant 0 : index
      %216 = vector.load %arg21[%c0_205, %c0_206, %c0_207] : memref<2x16x4xf32, #tpu.memory_space<vmem>>, vector<1x16x4xf32>
      %217 = vector.shape_cast %216 : vector<1x16x4xf32> to vector<16x4xf32>
      %c1_208 = arith.constant 1 : index
      %c0_209 = arith.constant 0 : index
      %c0_210 = arith.constant 0 : index
      %218 = vector.load %arg21[%c1_208, %c0_209, %c0_210] : memref<2x16x4xf32, #tpu.memory_space<vmem>>, vector<1x16x4xf32>
      %219 = vector.shape_cast %218 : vector<1x16x4xf32> to vector<16x4xf32>
      %c0_211 = arith.constant 0 : index
      %c0_212 = arith.constant 0 : index
      %c0_213 = arith.constant 0 : index
      %220 = vector.load %arg22[%c0_211, %c0_212, %c0_213] : memref<2x16x4xf32, #tpu.memory_space<vmem>>, vector<1x16x4xf32>
      %221 = vector.shape_cast %220 : vector<1x16x4xf32> to vector<16x4xf32>
      %c1_214 = arith.constant 1 : index
      %c0_215 = arith.constant 0 : index
      %c0_216 = arith.constant 0 : index
      %222 = vector.load %arg22[%c1_214, %c0_215, %c0_216] : memref<2x16x4xf32, #tpu.memory_space<vmem>>, vector<1x16x4xf32>
      %223 = vector.shape_cast %222 : vector<1x16x4xf32> to vector<16x4xf32>
      %c0_217 = arith.constant 0 : index
      %c0_218 = arith.constant 0 : index
      %c0_219 = arith.constant 0 : index
      %224 = vector.load %arg23[%c0_217, %c0_218, %c0_219] : memref<2x16x4xf32, #tpu.memory_space<vmem>>, vector<1x16x4xf32>
      %225 = vector.shape_cast %224 : vector<1x16x4xf32> to vector<16x4xf32>
      %c1_220 = arith.constant 1 : index
      %c0_221 = arith.constant 0 : index
      %c0_222 = arith.constant 0 : index
      %226 = vector.load %arg23[%c1_220, %c0_221, %c0_222] : memref<2x16x4xf32, #tpu.memory_space<vmem>>, vector<1x16x4xf32>
      %227 = vector.shape_cast %226 : vector<1x16x4xf32> to vector<16x4xf32>
      %228 = tpu.concatenate %217, %219, %221, %223, %225, %227 in 1 : vector<16x4xf32>, vector<16x4xf32>, vector<16x4xf32>, vector<16x4xf32>, vector<16x4xf32>, vector<16x4xf32> -> vector<16x24xf32>
      %c0_223 = arith.constant 0 : index
      %c0_224 = arith.constant 0 : index
      %c0_225 = arith.constant 0 : index
      %229 = vector.load %arg20[%c0_223, %c0_224, %c0_225] : memref<1x16x24xf32, #tpu.memory_space<vmem>>, vector<1x16x24xf32>
      %230 = vector.shape_cast %229 : vector<1x16x24xf32> to vector<16x24xf32>
      %231 = vector.shape_cast %228 : vector<16x24xf32> to vector<1x16x24xf32>
      tpu.vector_store %arg20[%c0_223, %c0_224, %c0_225], %231 {strides = array<i32>} : memref<1x16x24xf32, #tpu.memory_space<vmem>>, vector<1x16x24xf32>,
    } else {
    }
    return
  }
  func.func @transform_0(%arg0: i32, %arg1: i32) -> (i32, i32, i32) {
    %c0_i32 = arith.constant 0 : i32
    %c0_i32_0 = arith.constant 0 : i32
    %c0_i32_1 = arith.constant 0 : i32
    return %arg0, %c0_i32, %c0_i32_0 : i32, i32, i32
  }
  func.func @transform_1(%arg0: i32, %arg1: i32) -> (i32, i32, i32) {
    %c0_i32 = arith.constant 0 : i32
    %c0_i32_0 = arith.constant 0 : i32
    %c0_i32_1 = arith.constant 0 : i32
    return %arg0, %c0_i32, %c0_i32_0 : i32, i32, i32
  }
  func.func @transform_2(%arg0: i32, %arg1: i32) -> (i32, i32, i32) {
    %c0_i32 = arith.constant 0 : i32
    %c0_i32_0 = arith.constant 0 : i32
    %c0_i32_1 = arith.constant 0 : i32
    return %arg0, %c0_i32, %c0_i32_0 : i32, i32, i32
  }
  func.func @transform_3(%arg0: i32, %arg1: i32) -> (i32, i32, i32) {
    %c0_i32 = arith.constant 0 : i32
    %c0_i32_0 = arith.constant 0 : i32
    %c0_i32_1 = arith.constant 0 : i32
    return %arg0, %c0_i32, %c0_i32_0 : i32, i32, i32
  }
  func.func @transform_4(%arg0: i32, %arg1: i32) -> (i32, i32, i32) {
    %c0_i32 = arith.constant 0 : i32
    %c0_i32_0 = arith.constant 0 : i32
    %c0_i32_1 = arith.constant 0 : i32
    return %arg1, %c0_i32, %c0_i32_0 : i32, i32, i32
  }
  func.func @transform_5(%arg0: i32, %arg1: i32) -> (i32, i32, i32) {
    %c0_i32 = arith.constant 0 : i32
    %c0_i32_0 = arith.constant 0 : i32
    %c0_i32_1 = arith.constant 0 : i32
    return %arg1, %c0_i32, %c0_i32_0 : i32, i32, i32
  }
  func.func @transform_6(%arg0: i32, %arg1: i32) -> (i32, i32, i32, i32, i32) {
    %c0_i32 = arith.constant 0 : i32
    %c0_i32_0 = arith.constant 0 : i32
    %c0_i32_1 = arith.constant 0 : i32
    %c0_i32_2 = arith.constant 0 : i32
    %c0_i32_3 = arith.constant 0 : i32
    return %arg1, %c0_i32, %c0_i32_0, %c0_i32_1, %c0_i32_2 : i32, i32, i32, i32, i32
  }
  func.func @transform_7(%arg0: i32, %arg1: i32) -> (i32, i32, i32, i32) {
    %c0_i32 = arith.constant 0 : i32
    %c0_i32_0 = arith.constant 0 : i32
    %c0_i32_1 = arith.constant 0 : i32
    %c0_i32_2 = arith.constant 0 : i32
    return %arg1, %c0_i32, %c0_i32_0, %c0_i32_1 : i32, i32, i32, i32
  }
  func.func @transform_8(%arg0: i32, %arg1: i32) -> (i32, i32, i32, i32, i32) {
    %c0_i32 = arith.constant 0 : i32
    %c0_i32_0 = arith.constant 0 : i32
    %c0_i32_1 = arith.constant 0 : i32
    %c0_i32_2 = arith.constant 0 : i32
    %c0_i32_3 = arith.constant 0 : i32
    return %arg1, %c0_i32, %c0_i32_0, %c0_i32_1, %c0_i32_2 : i32, i32, i32, i32, i32
  }
  func.func @transform_9(%arg0: i32, %arg1: i32) -> (i32, i32, i32, i32) {
    %c0_i32 = arith.constant 0 : i32
    %c0_i32_0 = arith.constant 0 : i32
    %c0_i32_1 = arith.constant 0 : i32
    %c0_i32_2 = arith.constant 0 : i32
    return %arg1, %c0_i32, %c0_i32_0, %c0_i32_1 : i32, i32, i32, i32
  }
  func.func @transform_10(%arg0: i32, %arg1: i32) -> (i32, i32, i32, i32) {
    %c0_i32 = arith.constant 0 : i32
    %c0_i32_0 = arith.constant 0 : i32
    %c0_i32_1 = arith.constant 0 : i32
    %c0_i32_2 = arith.constant 0 : i32
    return %arg1, %c0_i32, %c0_i32_0, %c0_i32_1 : i32, i32, i32, i32
  }
  func.func @transform_11(%arg0: i32, %arg1: i32) -> (i32, i32, i32, i32) {
    %c0_i32 = arith.constant 0 : i32
    %c0_i32_0 = arith.constant 0 : i32
    %c0_i32_1 = arith.constant 0 : i32
    %c0_i32_2 = arith.constant 0 : i32
    return %arg1, %c0_i32, %c0_i32_0, %c0_i32_1 : i32, i32, i32, i32
  }
  func.func @transform_12(%arg0: i32, %arg1: i32) -> (i32, i32, i32, i32) {
    %c0_i32 = arith.constant 0 : i32
    %c0_i32_0 = arith.constant 0 : i32
    %c0_i32_1 = arith.constant 0 : i32
    %c0_i32_2 = arith.constant 0 : i32
    return %arg1, %c0_i32, %c0_i32_0, %c0_i32_1 : i32, i32, i32, i32
  }
  func.func @transform_13(%arg0: i32, %arg1: i32) -> (i32, i32, i32, i32) {
    %c0_i32 = arith.constant 0 : i32
    %c0_i32_0 = arith.constant 0 : i32
    %c0_i32_1 = arith.constant 0 : i32
    %c0_i32_2 = arith.constant 0 : i32
    return %arg1, %c0_i32, %c0_i32_0, %c0_i32_1 : i32, i32, i32, i32
  }
  func.func @transform_14(%arg0: i32, %arg1: i32) -> (i32, i32, i32) {
    %c0_i32 = arith.constant 0 : i32
    %c0_i32_0 = arith.constant 0 : i32
    %c0_i32_1 = arith.constant 0 : i32
    return %arg1, %c0_i32, %c0_i32_0 : i32, i32, i32
  }
  func.func @transform_15(%arg0: i32, %arg1: i32) -> (i32, i32, i32) {
    %c0_i32 = arith.constant 0 : i32
    %c0_i32_0 = arith.constant 0 : i32
    %c0_i32_1 = arith.constant 0 : i32
    return %arg1, %c0_i32, %c0_i32_0 : i32, i32, i32
  }
  func.func @transform_16(%arg0: i32, %arg1: i32) -> (i32, i32, i32) {
    %c0_i32 = arith.constant 0 : i32
    %c0_i32_0 = arith.constant 0 : i32
    %c0_i32_1 = arith.constant 0 : i32
    return %arg1, %c0_i32, %c0_i32_0 : i32, i32, i32
  }
  func.func @transform_17(%arg0: i32, %arg1: i32) -> (i32, i32, i32) {
    %c0_i32 = arith.constant 0 : i32
    %c0_i32_0 = arith.constant 0 : i32
    %c0_i32_1 = arith.constant 0 : i32
    return %arg1, %c0_i32, %c0_i32_0 : i32, i32, i32
  }
  func.func @transform_18(%arg0: i32, %arg1: i32) -> (i32, i32, i32) {
    %c0_i32 = arith.constant 0 : i32
    %c0_i32_0 = arith.constant 0 : i32
    %c0_i32_1 = arith.constant 0 : i32
    return %arg0, %c0_i32, %c0_i32_0 : i32, i32, i32
  }
}

</mosaic_0001>

<llo_original>
// kernel: _lambda_.1
$region0: #{_lambda_.1}
  #allocation0 [shape = 'u32[]', space=smem, size = 0x4, offset = 0x4, fixed_abs, tag = 'smem constant byte address 0x4 - core index']
  #allocation1 [shape = 'u32[72,128]{1,0:T(1,128)}', space=vmem, size = 0x9000, scoped, tag = 'internal scratch']
  #allocation2 [shape = 'f32[2,16,4]{2,1,0:T(8,128)}', space=vmem, size = 0x4000, scoped, tag = 'scratch operand']
  #allocation3 [shape = 'f32[2,16,4]{2,1,0:T(8,128)}', space=vmem, size = 0x4000, scoped, tag = 'scratch operand']
  #allocation4 [shape = 'f32[2,16,4]{2,1,0:T(8,128)}', space=vmem, size = 0x4000, scoped, tag = 'scratch operand']
  #allocation5 [shape = 'f32[16,16]{1,0:T(8,128)}', space=vmem, size = 0x2000, scoped, tag = 'scratch operand']
  #allocation6 [shape = 'bf16[32,16]{1,0:T(8,128)(2,1)}', space=vmem, size = 0x2000, scoped, tag = 'scratch operand']
  #allocation7 [shape = 'f32[16,16]{1,0:T(8,128)}', space=vmem, size = 0x2000, scoped, tag = 'scratch operand']
  %s0 = inlined_call_operand.vmem [shape: f32[2,16,8], index: 0, kind: input, shape index: {}]
  %s1 = inlined_call_operand.vmem [shape: f32[2,16,8], index: 1, kind: input, shape index: {}]
  %s2 = inlined_call_operand.vmem [shape: f32[2,16,8], index: 2, kind: input, shape index: {}]
  %s3 = inlined_call_operand.vmem [shape: f32[2,16,1], index: 3, kind: input, shape index: {}]
  %s4 = inlined_call_operand.vmem [shape: bf16[4,4,16], index: 4, kind: input, shape index: {}]
  %s5 = inlined_call_operand.vmem [shape: f32[4,1,16], index: 5, kind: input, shape index: {}]
  %s6 = inlined_call_operand.vmem [shape: bf16[4,2,3,16,16], index: 6, kind: input, shape index: {}]
  %s7 = inlined_call_operand.vmem [shape: f32[4,2,1,16], index: 7, kind: input, shape index: {}]
  %s8 = inlined_call_operand.vmem [shape: bf16[4,2,3,16,16], index: 8, kind: input, shape index: {}]
  %s9 = inlined_call_operand.vmem [shape: f32[4,2,1,16], index: 9, kind: input, shape index: {}]
  %s10 = inlined_call_operand.vmem [shape: bf16[4,1,16,16], index: 10, kind: input, shape index: {}]
  %s11 = inlined_call_operand.vmem [shape: f32[4,1,1,16], index: 11, kind: input, shape index: {}]
  %s12 = inlined_call_operand.vmem [shape: bf16[4,2,16,16], index: 12, kind: input, shape index: {}]
  %s13 = inlined_call_operand.vmem [shape: f32[4,2,1,16], index: 13, kind: input, shape index: {}]
  %s14 = inlined_call_operand.vmem [shape: bf16[4,16,4], index: 14, kind: input, shape index: {}]
  %s15 = inlined_call_operand.vmem [shape: f32[4,1,4], index: 15, kind: input, shape index: {}]
  %s16 = inlined_call_operand.vmem [shape: bf16[4,16,4], index: 16, kind: input, shape index: {}]
  %s17 = inlined_call_operand.vmem [shape: f32[4,1,4], index: 17, kind: input, shape index: {}]
  %s18 = inlined_call_operand.vmem [shape: f32[2,16,24], index: 18, kind: output, shape index: {}]
  %s19 = sld [smem:[#allocation0]]
  $region113: #{_lambda_.1} parent=0
    _
  %s21 = ssub.s32 1, %s19
  %s22 = scalar_select 0, %s21, %s19
  loop: start=0, step=1, limit=10
  $region2: #{_lambda_.1} parent=0 // loop_pre_header
    _
  $region3: #{_lambda_.1} parent=0 // loop_header
    %s24 = sphi 0, %s28
    %p25 = scmp.ge.s32.totalorder %s24, 10
    %s31 = sphi 0, %s43
    %s32 = sphi 0, %s39
    %s33 = sphi 0, %s31
    %s34 = sphi 0, %s32
    %s35 = sphi 0, %s33
    %s36 = sphi 0, %s34
    %s46 = sphi 0, %s48
    %s49 = sphi 0, %s46
    %s50 = sphi 0, %s49
    %s66 = sphi 0, %s50
    %s72 = sphi 0, %s74
    %s75 = sphi 0, %s72
    %s76 = sphi 0, %s75
    %s92 = sphi 0, %s76
    %s98 = sphi 0, %s100
    %s101 = sphi 0, %s98
    %s102 = sphi 0, %s101
    %s118 = sphi 0, %s102
    %s124 = sphi 0, %s126
    %s127 = sphi 0, %s124
    %s128 = sphi 0, %s127
    %s144 = sphi 0, %s128
    %s150 = sphi 0, %s152
    %s153 = sphi 0, %s150
    %s154 = sphi 0, %s153
    %s170 = sphi 0, %s154
    %s176 = sphi 0, %s178
    %s179 = sphi 0, %s176
    %s180 = sphi 0, %s179
    %s196 = sphi 0, %s180
    %s202 = sphi 0, %s204
    %s205 = sphi 0, %s202
    %s206 = sphi 0, %s205
    %s222 = sphi 0, %s206
    %s228 = sphi 0, %s230
    %s231 = sphi 0, %s228
    %s232 = sphi 0, %s231
    %s248 = sphi 0, %s232
    %s254 = sphi 0, %s256
    %s257 = sphi 0, %s254
    %s258 = sphi 0, %s257
    %s274 = sphi 0, %s258
    %s280 = sphi 0, %s282
    %s283 = sphi 0, %s280
    %s284 = sphi 0, %s283
    %s300 = sphi 0, %s284
    %s306 = sphi 0, %s308
    %s309 = sphi 0, %s306
    %s310 = sphi 0, %s309
    %s326 = sphi 0, %s310
    %s332 = sphi 0, %s334
    %s335 = sphi 0, %s332
    %s336 = sphi 0, %s335
    %s352 = sphi 0, %s336
    %s358 = sphi 0, %s360
    %s361 = sphi 0, %s358
    %s362 = sphi 0, %s361
    %s378 = sphi 0, %s362
    %s384 = sphi 0, %s386
    %s387 = sphi 0, %s384
    %s388 = sphi 0, %s387
    %s404 = sphi 0, %s388
    %s410 = sphi 0, %s412
    %s413 = sphi 0, %s410
    %s414 = sphi 0, %s413
    %s430 = sphi 0, %s414
    %s436 = sphi 0, %s438
    %s439 = sphi 0, %s436
    %s440 = sphi 0, %s439
    %s456 = sphi 0, %s440
    %s462 = sphi 0, %s464
    %s465 = sphi 0, %s462
    %s466 = sphi 0, %s465
    %s482 = sphi 0, %s466
    %s488 = sphi 0, %s490
    %s491 = sphi 0, %s488
    %s492 = sphi 0, %s491
    %s508 = sphi 0, %s492
    %s514 = sphi 0, %s516
    %s517 = sphi 0, %s514
    %s518 = sphi 0, %s517
    %s534 = sphi 0, %s518
  $region4: #{_lambda_.1} parent=0 // loop_header_branch
    %27 = sbr.rel (%p25) target = $region8
  $region5: #{_lambda_.1} parent=0 // loop_body
    %s29 = ssub.s32 %s24, 1
    %s30 = ssub.s32 %s24, 2
    %s37 = sadd.s32 1, %s32
    %p38 = scmp.ge.s32.totalorder %s37, 4
    %s39 = scalar_select %p38, 0, %s37
    %s40 = sadd.s32 1, %s31
    %s41 = scalar_select %p38, %s40, %s31
    %p42 = scmp.ge.s32.totalorder %s41, 2
    %s43 = scalar_select %p42, 0, %s41
    %s44 = ssub.s32 %s31, %s43
    %p45 = scmp.eq.s32.totalorder %s44, 0
    %s47 = sadd.s32 %s46, 1
    %s48 = scalar_select %p45, %s46, %s47
    %p51 = pneg %p45
    %p52 = scmp.eq.s32.totalorder %s24, 7
    %p53 = por %p51, %p52
    %p54 = scmp.ne.s32.totalorder %s46, %s49
    %p55 = scmp.eq.s32.totalorder %s24, 0
    %p56 = por %p54, %p55
    %p57 = scmp.ne.s32.totalorder %s46, %s49
    %p58 = scmp.eq.s32.totalorder %s29, 7
    %p59 = por %p57, %p58
    %p60 = scmp.ne.s32.totalorder %s49, %s50
    %p61 = scmp.eq.s32.totalorder %s29, 0
    %p62 = por %p60, %p61
    %p63 = scmp.ne.s32.totalorder %s49, %s50
    %p64 = scmp.eq.s32.totalorder %s30, 7
    %p65 = por %p63, %p64
    %p67 = scmp.ne.s32.totalorder %s50, %s66
    %p68 = scmp.eq.s32.totalorder %s30, 0
    %p69 = por %p67, %p68
    %s70 = ssub.s32 %s31, %s43
    %p71 = scmp.eq.s32.totalorder %s70, 0
    %s73 = sadd.s32 %s72, 1
    %s74 = scalar_select %p71, %s72, %s73
    %p77 = pneg %p71
    %p78 = scmp.eq.s32.totalorder %s24, 7
    %p79 = por %p77, %p78
    %p80 = scmp.ne.s32.totalorder %s72, %s75
    %p81 = scmp.eq.s32.totalorder %s24, 0
    %p82 = por %p80, %p81
    %p83 = scmp.ne.s32.totalorder %s72, %s75
    %p84 = scmp.eq.s32.totalorder %s29, 7
    %p85 = por %p83, %p84
    %p86 = scmp.ne.s32.totalorder %s75, %s76
    %p87 = scmp.eq.s32.totalorder %s29, 0
    %p88 = por %p86, %p87
    %p89 = scmp.ne.s32.totalorder %s75, %s76
    %p90 = scmp.eq.s32.totalorder %s30, 7
    %p91 = por %p89, %p90
    %p93 = scmp.ne.s32.totalorder %s76, %s92
    %p94 = scmp.eq.s32.totalorder %s30, 0
    %p95 = por %p93, %p94
    %s96 = ssub.s32 %s31, %s43
    %p97 = scmp.eq.s32.totalorder %s96, 0
    %s99 = sadd.s32 %s98, 1
    %s100 = scalar_select %p97, %s98, %s99
    %p103 = pneg %p97
    %p104 = scmp.eq.s32.totalorder %s24, 7
    %p105 = por %p103, %p104
    %p106 = scmp.ne.s32.totalorder %s98, %s101
    %p107 = scmp.eq.s32.totalorder %s24, 0
    %p108 = por %p106, %p107
    %p109 = scmp.ne.s32.totalorder %s98, %s101
    %p110 = scmp.eq.s32.totalorder %s29, 7
    %p111 = por %p109, %p110
    %p112 = scmp.ne.s32.totalorder %s101, %s102
    %p113 = scmp.eq.s32.totalorder %s29, 0
    %p114 = por %p112, %p113
    %p115 = scmp.ne.s32.totalorder %s101, %s102
    %p116 = scmp.eq.s32.totalorder %s30, 7
    %p117 = por %p115, %p116
    %p119 = scmp.ne.s32.totalorder %s102, %s118
    %p120 = scmp.eq.s32.totalorder %s30, 0
    %p121 = por %p119, %p120
    %s122 = ssub.s32 %s31, %s43
    %p123 = scmp.eq.s32.totalorder %s122, 0
    %s125 = sadd.s32 %s124, 1
    %s126 = scalar_select %p123, %s124, %s125
    %p129 = pneg %p123
    %p130 = scmp.eq.s32.totalorder %s24, 7
    %p131 = por %p129, %p130
    %p132 = scmp.ne.s32.totalorder %s124, %s127
    %p133 = scmp.eq.s32.totalorder %s24, 0
    %p134 = por %p132, %p133
    %p135 = scmp.ne.s32.totalorder %s124, %s127
    %p136 = scmp.eq.s32.totalorder %s29, 7
    %p137 = por %p135, %p136
    %p138 = scmp.ne.s32.totalorder %s127, %s128
    %p139 = scmp.eq.s32.totalorder %s29, 0
    %p140 = por %p138, %p139
    %p141 = scmp.ne.s32.totalorder %s127, %s128
    %p142 = scmp.eq.s32.totalorder %s30, 7
    %p143 = por %p141, %p142
    %p145 = scmp.ne.s32.totalorder %s128, %s144
    %p146 = scmp.eq.s32.totalorder %s30, 0
    %p147 = por %p145, %p146
    %s148 = ssub.s32 %s32, %s39
    %p149 = scmp.eq.s32.totalorder %s148, 0
    %s151 = sadd.s32 %s150, 1
    %s152 = scalar_select %p149, %s150, %s151
    %p155 = pneg %p149
    %p156 = scmp.eq.s32.totalorder %s24, 7
    %p157 = por %p155, %p156
    %p158 = scmp.ne.s32.totalorder %s150, %s153
    %p159 = scmp.eq.s32.totalorder %s24, 0
    %p160 = por %p158, %p159
    %p161 = scmp.ne.s32.totalorder %s150, %s153
    %p162 = scmp.eq.s32.totalorder %s29, 7
    %p163 = por %p161, %p162
    %p164 = scmp.ne.s32.totalorder %s153, %s154
    %p165 = scmp.eq.s32.totalorder %s29, 0
    %p166 = por %p164, %p165
    %p167 = scmp.ne.s32.totalorder %s153, %s154
    %p168 = scmp.eq.s32.totalorder %s30, 7
    %p169 = por %p167, %p168
    %p171 = scmp.ne.s32.totalorder %s154, %s170
    %p172 = scmp.eq.s32.totalorder %s30, 0
    %p173 = por %p171, %p172
    %s174 = ssub.s32 %s32, %s39
    %p175 = scmp.eq.s32.totalorder %s174, 0
    %s177 = sadd.s32 %s176, 1
    %s178 = scalar_select %p175, %s176, %s177
    %p181 = pneg %p175
    %p182 = scmp.eq.s32.totalorder %s24, 7
    %p183 = por %p181, %p182
    %p184 = scmp.ne.s32.totalorder %s176, %s179
    %p185 = scmp.eq.s32.totalorder %s24, 0
    %p186 = por %p184, %p185
    %p187 = scmp.ne.s32.totalorder %s176, %s179
    %p188 = scmp.eq.s32.totalorder %s29, 7
    %p189 = por %p187, %p188
    %p190 = scmp.ne.s32.totalorder %s179, %s180
    %p191 = scmp.eq.s32.totalorder %s29, 0
    %p192 = por %p190, %p191
    %p193 = scmp.ne.s32.totalorder %s179, %s180
    %p194 = scmp.eq.s32.totalorder %s30, 7
    %p195 = por %p193, %p194
    %p197 = scmp.ne.s32.totalorder %s180, %s196
    %p198 = scmp.eq.s32.totalorder %s30, 0
    %p199 = por %p197, %p198
    %s200 = ssub.s32 %s32, %s39
    %p201 = scmp.eq.s32.totalorder %s200, 0
    %s203 = sadd.s32 %s202, 1
    %s204 = scalar_select %p201, %s202, %s203
    %p207 = pneg %p201
    %p208 = scmp.eq.s32.totalorder %s24, 7
    %p209 = por %p207, %p208
    %p210 = scmp.ne.s32.totalorder %s202, %s205
    %p211 = scmp.eq.s32.totalorder %s24, 0
    %p212 = por %p210, %p211
    %p213 = scmp.ne.s32.totalorder %s202, %s205
    %p214 = scmp.eq.s32.totalorder %s29, 7
    %p215 = por %p213, %p214
    %p216 = scmp.ne.s32.totalorder %s205, %s206
    %p217 = scmp.eq.s32.totalorder %s29, 0
    %p218 = por %p216, %p217
    %p219 = scmp.ne.s32.totalorder %s205, %s206
    %p220 = scmp.eq.s32.totalorder %s30, 7
    %p221 = por %p219, %p220
    %p223 = scmp.ne.s32.totalorder %s206, %s222
    %p224 = scmp.eq.s32.totalorder %s30, 0
    %p225 = por %p223, %p224
    %s226 = ssub.s32 %s32, %s39
    %p227 = scmp.eq.s32.totalorder %s226, 0
    %s229 = sadd.s32 %s228, 1
    %s230 = scalar_select %p227, %s228, %s229
    %p233 = pneg %p227
    %p234 = scmp.eq.s32.totalorder %s24, 7
    %p235 = por %p233, %p234
    %p236 = scmp.ne.s32.totalorder %s228, %s231
    %p237 = scmp.eq.s32.totalorder %s24, 0
    %p238 = por %p236, %p237
    %p239 = scmp.ne.s32.totalorder %s228, %s231
    %p240 = scmp.eq.s32.totalorder %s29, 7
    %p241 = por %p239, %p240
    %p242 = scmp.ne.s32.totalorder %s231, %s232
    %p243 = scmp.eq.s32.totalorder %s29, 0
    %p244 = por %p242, %p243
    %p245 = scmp.ne.s32.totalorder %s231, %s232
    %p246 = scmp.eq.s32.totalorder %s30, 7
    %p247 = por %p245, %p246
    %p249 = scmp.ne.s32.totalorder %s232, %s248
    %p250 = scmp.eq.s32.totalorder %s30, 0
    %p251 = por %p249, %p250
    %s252 = ssub.s32 %s32, %s39
    %p253 = scmp.eq.s32.totalorder %s252, 0
    %s255 = sadd.s32 %s254, 1
    %s256 = scalar_select %p253, %s254, %s255
    %p259 = pneg %p253
    %p260 = scmp.eq.s32.totalorder %s24, 7
    %p261 = por %p259, %p260
    %p262 = scmp.ne.s32.totalorder %s254, %s257
    %p263 = scmp.eq.s32.totalorder %s24, 0
    %p264 = por %p262, %p263
    %p265 = scmp.ne.s32.totalorder %s254, %s257
    %p266 = scmp.eq.s32.totalorder %s29, 7
    %p267 = por %p265, %p266
    %p268 = scmp.ne.s32.totalorder %s257, %s258
    %p269 = scmp.eq.s32.totalorder %s29, 0
    %p270 = por %p268, %p269
    %p271 = scmp.ne.s32.totalorder %s257, %s258
    %p272 = scmp.eq.s32.totalorder %s30, 7
    %p273 = por %p271, %p272
    %p275 = scmp.ne.s32.totalorder %s258, %s274
    %p276 = scmp.eq.s32.totalorder %s30, 0
    %p277 = por %p275, %p276
    %s278 = ssub.s32 %s32, %s39
    %p279 = scmp.eq.s32.totalorder %s278, 0
    %s281 = sadd.s32 %s280, 1
    %s282 = scalar_select %p279, %s280, %s281
    %p285 = pneg %p279
    %p286 = scmp.eq.s32.totalorder %s24, 7
    %p287 = por %p285, %p286
    %p288 = scmp.ne.s32.totalorder %s280, %s283
    %p289 = scmp.eq.s32.totalorder %s24, 0
    %p290 = por %p288, %p289
    %p291 = scmp.ne.s32.totalorder %s280, %s283
    %p292 = scmp.eq.s32.totalorder %s29, 7
    %p293 = por %p291, %p292
    %p294 = scmp.ne.s32.totalorder %s283, %s284
    %p295 = scmp.eq.s32.totalorder %s29, 0
    %p296 = por %p294, %p295
    %p297 = scmp.ne.s32.totalorder %s283, %s284
    %p298 = scmp.eq.s32.totalorder %s30, 7
    %p299 = por %p297, %p298
    %p301 = scmp.ne.s32.totalorder %s284, %s300
    %p302 = scmp.eq.s32.totalorder %s30, 0
    %p303 = por %p301, %p302
    %s304 = ssub.s32 %s32, %s39
    %p305 = scmp.eq.s32.totalorder %s304, 0
    %s307 = sadd.s32 %s306, 1
    %s308 = scalar_select %p305, %s306, %s307
    %p311 = pneg %p305
    %p312 = scmp.eq.s32.totalorder %s24, 7
    %p313 = por %p311, %p312
    %p314 = scmp.ne.s32.totalorder %s306, %s309
    %p315 = scmp.eq.s32.totalorder %s24, 0
    %p316 = por %p314, %p315
    %p317 = scmp.ne.s32.totalorder %s306, %s309
    %p318 = scmp.eq.s32.totalorder %s29, 7
    %p319 = por %p317, %p318
    %p320 = scmp.ne.s32.totalorder %s309, %s310
    %p321 = scmp.eq.s32.totalorder %s29, 0
    %p322 = por %p320, %p321
    %p323 = scmp.ne.s32.totalorder %s309, %s310
    %p324 = scmp.eq.s32.totalorder %s30, 7
    %p325 = por %p323, %p324
    %p327 = scmp.ne.s32.totalorder %s310, %s326
    %p328 = scmp.eq.s32.totalorder %s30, 0
    %p329 = por %p327, %p328
    %s330 = ssub.s32 %s32, %s39
    %p331 = scmp.eq.s32.totalorder %s330, 0
    %s333 = sadd.s32 %s332, 1
    %s334 = scalar_select %p331, %s332, %s333
    %p337 = pneg %p331
    %p338 = scmp.eq.s32.totalorder %s24, 7
    %p339 = por %p337, %p338
    %p340 = scmp.ne.s32.totalorder %s332, %s335
    %p341 = scmp.eq.s32.totalorder %s24, 0
    %p342 = por %p340, %p341
    %p343 = scmp.ne.s32.totalorder %s332, %s335
    %p344 = scmp.eq.s32.totalorder %s29, 7
    %p345 = por %p343, %p344
    %p346 = scmp.ne.s32.totalorder %s335, %s336
    %p347 = scmp.eq.s32.totalorder %s29, 0
    %p348 = por %p346, %p347
    %p349 = scmp.ne.s32.totalorder %s335, %s336
    %p350 = scmp.eq.s32.totalorder %s30, 7
    %p351 = por %p349, %p350
    %p353 = scmp.ne.s32.totalorder %s336, %s352
    %p354 = scmp.eq.s32.totalorder %s30, 0
    %p355 = por %p353, %p354
    %s356 = ssub.s32 %s32, %s39
    %p357 = scmp.eq.s32.totalorder %s356, 0
    %s359 = sadd.s32 %s358, 1
    %s360 = scalar_select %p357, %s358, %s359
    %p363 = pneg %p357
    %p364 = scmp.eq.s32.totalorder %s24, 7
    %p365 = por %p363, %p364
    %p366 = scmp.ne.s32.totalorder %s358, %s361
    %p367 = scmp.eq.s32.totalorder %s24, 0
    %p368 = por %p366, %p367
    %p369 = scmp.ne.s32.totalorder %s358, %s361
    %p370 = scmp.eq.s32.totalorder %s29, 7
    %p371 = por %p369, %p370
    %p372 = scmp.ne.s32.totalorder %s361, %s362
    %p373 = scmp.eq.s32.totalorder %s29, 0
    %p374 = por %p372, %p373
    %p375 = scmp.ne.s32.totalorder %s361, %s362
    %p376 = scmp.eq.s32.totalorder %s30, 7
    %p377 = por %p375, %p376
    %p379 = scmp.ne.s32.totalorder %s362, %s378
    %p380 = scmp.eq.s32.totalorder %s30, 0
    %p381 = por %p379, %p380
    %s382 = ssub.s32 %s32, %s39
    %p383 = scmp.eq.s32.totalorder %s382, 0
    %s385 = sadd.s32 %s384, 1
    %s386 = scalar_select %p383, %s384, %s385
    %p389 = pneg %p383
    %p390 = scmp.eq.s32.totalorder %s24, 7
    %p391 = por %p389, %p390
    %p392 = scmp.ne.s32.totalorder %s384, %s387
    %p393 = scmp.eq.s32.totalorder %s24, 0
    %p394 = por %p392, %p393
    %p395 = scmp.ne.s32.totalorder %s384, %s387
    %p396 = scmp.eq.s32.totalorder %s29, 7
    %p397 = por %p395, %p396
    %p398 = scmp.ne.s32.totalorder %s387, %s388
    %p399 = scmp.eq.s32.totalorder %s29, 0
    %p400 = por %p398, %p399
    %p401 = scmp.ne.s32.totalorder %s387, %s388
    %p402 = scmp.eq.s32.totalorder %s30, 7
    %p403 = por %p401, %p402
    %p405 = scmp.ne.s32.totalorder %s388, %s404
    %p406 = scmp.eq.s32.totalorder %s30, 0
    %p407 = por %p405, %p406
    %s408 = ssub.s32 %s32, %s39
    %p409 = scmp.eq.s32.totalorder %s408, 0
    %s411 = sadd.s32 %s410, 1
    %s412 = scalar_select %p409, %s410, %s411
    %p415 = pneg %p409
    %p416 = scmp.eq.s32.totalorder %s24, 7
    %p417 = por %p415, %p416
    %p418 = scmp.ne.s32.totalorder %s410, %s413
    %p419 = scmp.eq.s32.totalorder %s24, 0
    %p420 = por %p418, %p419
    %p421 = scmp.ne.s32.totalorder %s410, %s413
    %p422 = scmp.eq.s32.totalorder %s29, 7
    %p423 = por %p421, %p422
    %p424 = scmp.ne.s32.totalorder %s413, %s414
    %p425 = scmp.eq.s32.totalorder %s29, 0
    %p426 = por %p424, %p425
    %p427 = scmp.ne.s32.totalorder %s413, %s414
    %p428 = scmp.eq.s32.totalorder %s30, 7
    %p429 = por %p427, %p428
    %p431 = scmp.ne.s32.totalorder %s414, %s430
    %p432 = scmp.eq.s32.totalorder %s30, 0
    %p433 = por %p431, %p432
    %s434 = ssub.s32 %s32, %s39
    %p435 = scmp.eq.s32.totalorder %s434, 0
    %s437 = sadd.s32 %s436, 1
    %s438 = scalar_select %p435, %s436, %s437
    %p441 = pneg %p435
    %p442 = scmp.eq.s32.totalorder %s24, 7
    %p443 = por %p441, %p442
    %p444 = scmp.ne.s32.totalorder %s436, %s439
    %p445 = scmp.eq.s32.totalorder %s24, 0
    %p446 = por %p444, %p445
    %p447 = scmp.ne.s32.totalorder %s436, %s439
    %p448 = scmp.eq.s32.totalorder %s29, 7
    %p449 = por %p447, %p448
    %p450 = scmp.ne.s32.totalorder %s439, %s440
    %p451 = scmp.eq.s32.totalorder %s29, 0
    %p452 = por %p450, %p451
    %p453 = scmp.ne.s32.totalorder %s439, %s440
    %p454 = scmp.eq.s32.totalorder %s30, 7
    %p455 = por %p453, %p454
    %p457 = scmp.ne.s32.totalorder %s440, %s456
    %p458 = scmp.eq.s32.totalorder %s30, 0
    %p459 = por %p457, %p458
    %s460 = ssub.s32 %s32, %s39
    %p461 = scmp.eq.s32.totalorder %s460, 0
    %s463 = sadd.s32 %s462, 1
    %s464 = scalar_select %p461, %s462, %s463
    %p467 = pneg %p461
    %p468 = scmp.eq.s32.totalorder %s24, 7
    %p469 = por %p467, %p468
    %p470 = scmp.ne.s32.totalorder %s462, %s465
    %p471 = scmp.eq.s32.totalorder %s24, 0
    %p472 = por %p470, %p471
    %p473 = scmp.ne.s32.totalorder %s462, %s465
    %p474 = scmp.eq.s32.totalorder %s29, 7
    %p475 = por %p473, %p474
    %p476 = scmp.ne.s32.totalorder %s465, %s466
    %p477 = scmp.eq.s32.totalorder %s29, 0
    %p478 = por %p476, %p477
    %p479 = scmp.ne.s32.totalorder %s465, %s466
    %p480 = scmp.eq.s32.totalorder %s30, 7
    %p481 = por %p479, %p480
    %p483 = scmp.ne.s32.totalorder %s466, %s482
    %p484 = scmp.eq.s32.totalorder %s30, 0
    %p485 = por %p483, %p484
    %s486 = ssub.s32 %s32, %s39
    %p487 = scmp.eq.s32.totalorder %s486, 0
    %s489 = sadd.s32 %s488, 1
    %s490 = scalar_select %p487, %s488, %s489
    %p493 = pneg %p487
    %p494 = scmp.eq.s32.totalorder %s24, 7
    %p495 = por %p493, %p494
    %p496 = scmp.ne.s32.totalorder %s488, %s491
    %p497 = scmp.eq.s32.totalorder %s24, 0
    %p498 = por %p496, %p497
    %p499 = scmp.ne.s32.totalorder %s488, %s491
    %p500 = scmp.eq.s32.totalorder %s29, 7
    %p501 = por %p499, %p500
    %p502 = scmp.ne.s32.totalorder %s491, %s492
    %p503 = scmp.eq.s32.totalorder %s29, 0
    %p504 = por %p502, %p503
    %p505 = scmp.ne.s32.totalorder %s491, %s492
    %p506 = scmp.eq.s32.totalorder %s30, 7
    %p507 = por %p505, %p506
    %p509 = scmp.ne.s32.totalorder %s492, %s508
    %p510 = scmp.eq.s32.totalorder %s30, 0
    %p511 = por %p509, %p510
    %s512 = ssub.s32 %s31, %s43
    %p513 = scmp.eq.s32.totalorder %s512, 0
    %s515 = sadd.s32 %s514, 1
    %s516 = scalar_select %p513, %s514, %s515
    %p519 = pneg %p513
    %p520 = scmp.eq.s32.totalorder %s24, 7
    %p521 = por %p519, %p520
    %p522 = scmp.ne.s32.totalorder %s514, %s517
    %p523 = scmp.eq.s32.totalorder %s24, 0
    %p524 = por %p522, %p523
    %p525 = scmp.ne.s32.totalorder %s514, %s517
    %p526 = scmp.eq.s32.totalorder %s29, 7
    %p527 = por %p525, %p526
    %p528 = scmp.ne.s32.totalorder %s517, %s518
    %p529 = scmp.eq.s32.totalorder %s29, 0
    %p530 = por %p528, %p529
    %p531 = scmp.ne.s32.totalorder %s517, %s518
    %p532 = scmp.eq.s32.totalorder %s30, 7
    %p533 = por %p531, %p532
    %p535 = scmp.ne.s32.totalorder %s518, %s534
    %p536 = scmp.eq.s32.totalorder %s30, 0
    %p537 = por %p535, %p536
    %p538 = scmp.le.s32.totalorder 1, %s24
    %p539 = scmp.lt.s32.totalorder %s24, 9
    %p540 = pnand %p538, %p539
    %p541 = pneg %p540
    // Predicated region
    $region9: #{_lambda_.1} parent=5 // pred_check
      _
    $region10: #{_lambda_.1} parent=5 // pred_check_branch
      %543 = sbr.rel (%p540) target = $region12
    $region11: #{_lambda_.1} parent=5 // pred_region
      %s544 = ssub.s32 %s24, 1
    $region12: #{_lambda_.1} parent=5 // pred_fallthru
      _
    %p545 = scmp.lt.s32.totalorder %s24, 8
    // Predicated region
    $region13: #{_lambda_.1} parent=5 // pred_check
      %p546 = pneg %p545
    $region14: #{_lambda_.1} parent=5 // pred_check_branch
      %548 = sbr.rel (%p546) target = $region16
    $region15: #{_lambda_.1} parent=5 // pred_region
      // Predicated region
      $region17: #{_lambda_.1} parent=15 // pred_check
        %p549 = pneg %p56
      $region18: #{_lambda_.1} parent=15 // pred_check_branch
        %551 = sbr.rel (%p549) target = $region20
      $region19: #{_lambda_.1} parent=15 // pred_region
        %p552 = scmp.lt.s32.totalorder %s31, 1
        %s553 = scalar_select %p552, %s31, 1
        %s554 = smul.addr %s553, 2
        %s555 = smul.addr %s554, 8
        %s556 = scalar_lea.vmem %s0, %s555
      $region20: #{_lambda_.1} parent=15 // pred_fallthru
        _
      // Predicated region
      $region21: #{_lambda_.1} parent=15 // pred_check
        %p557 = pneg %p82
      $region22: #{_lambda_.1} parent=15 // pred_check_branch
        %559 = sbr.rel (%p557) target = $region24
      $region23: #{_lambda_.1} parent=15 // pred_region
        %p560 = scmp.lt.s32.totalorder %s31, 1
        %s561 = scalar_select %p560, %s31, 1
        %s562 = smul.addr %s561, 2
        %s563 = smul.addr %s562, 8
        %s564 = scalar_lea.vmem %s1, %s563
      $region24: #{_lambda_.1} parent=15 // pred_fallthru
        _
      // Predicated region
      $region25: #{_lambda_.1} parent=15 // pred_check
        %p565 = pneg %p108
      $region26: #{_lambda_.1} parent=15 // pred_check_branch
        %567 = sbr.rel (%p565) target = $region28
      $region27: #{_lambda_.1} parent=15 // pred_region
        %p568 = scmp.lt.s32.totalorder %s31, 1
        %s569 = scalar_select %p568, %s31, 1
        %s570 = smul.addr %s569, 2
        %s571 = smul.addr %s570, 8
        %s572 = scalar_lea.vmem %s2, %s571
      $region28: #{_lambda_.1} parent=15 // pred_fallthru
        _
      // Predicated region
      $region29: #{_lambda_.1} parent=15 // pred_check
        %p573 = pneg %p134
      $region30: #{_lambda_.1} parent=15 // pred_check_branch
        %575 = sbr.rel (%p573) target = $region32
      $region31: #{_lambda_.1} parent=15 // pred_region
        %p576 = scmp.lt.s32.totalorder %s31, 1
        %s577 = scalar_select %p576, %s31, 1
        %s578 = smul.addr %s577, 2
        %s579 = smul.addr %s578, 8
        %s580 = scalar_lea.vmem %s3, %s579
      $region32: #{_lambda_.1} parent=15 // pred_fallthru
        _
      // Predicated region
      $region33: #{_lambda_.1} parent=15 // pred_check
        %p581 = pneg %p160
      $region34: #{_lambda_.1} parent=15 // pred_check_branch
        %583 = sbr.rel (%p581) target = $region36
      $region35: #{_lambda_.1} parent=15 // pred_region
        %p584 = scmp.lt.s32.totalorder %s32, 3
        %s585 = scalar_select %p584, %s32, 3
        %s586 = smul.addr %s585, 2
        %s587 = scalar_lea.vmem %s4, %s586
      $region36: #{_lambda_.1} parent=15 // pred_fallthru
        _
      // Predicated region
      $region37: #{_lambda_.1} parent=15 // pred_check
        %p588 = pneg %p186
      $region38: #{_lambda_.1} parent=15 // pred_check_branch
        %590 = sbr.rel (%p588) target = $region40
      $region39: #{_lambda_.1} parent=15 // pred_region
        %p591 = scmp.lt.s32.totalorder %s32, 3
        %s592 = scalar_select %p591, %s32, 3
        %s593 = scalar_lea.vmem %s5, %s592
      $region40: #{_lambda_.1} parent=15 // pred_fallthru
        _
      // Predicated region
      $region41: #{_lambda_.1} parent=15 // pred_check
        %p594 = pneg %p212
      $region42: #{_lambda_.1} parent=15 // pred_check_branch
        %596 = sbr.rel (%p594) target = $region44
      $region43: #{_lambda_.1} parent=15 // pred_region
        %p597 = scmp.lt.s32.totalorder %s32, 3
        %s598 = scalar_select %p597, %s32, 3
        %s599 = smul.addr %s598, 12
        %s600 = smul.addr %s599, 4
        %s601 = scalar_lea.vmem %s6, %s600
      $region44: #{_lambda_.1} parent=15 // pred_fallthru
        _
      // Predicated region
      $region45: #{_lambda_.1} parent=15 // pred_check
        %p602 = pneg %p238
      $region46: #{_lambda_.1} parent=15 // pred_check_branch
        %604 = sbr.rel (%p602) target = $region48
      $region47: #{_lambda_.1} parent=15 // pred_region
        %p605 = scmp.lt.s32.totalorder %s32, 3
        %s606 = scalar_select %p605, %s32, 3
        %s607 = smul.addr %s606, 2
        %s608 = scalar_lea.vmem %s7, %s607
      $region48: #{_lambda_.1} parent=15 // pred_fallthru
        _
      // Predicated region
      $region49: #{_lambda_.1} parent=15 // pred_check
        %p609 = pneg %p264
      $region50: #{_lambda_.1} parent=15 // pred_check_branch
        %611 = sbr.rel (%p609) target = $region52
      $region51: #{_lambda_.1} parent=15 // pred_region
        %p612 = scmp.lt.s32.totalorder %s32, 3
        %s613 = scalar_select %p612, %s32, 3
        %s614 = smul.addr %s613, 12
        %s615 = smul.addr %s614, 4
        %s616 = scalar_lea.vmem %s8, %s615
      $region52: #{_lambda_.1} parent=15 // pred_fallthru
        _
      // Predicated region
      $region53: #{_lambda_.1} parent=15 // pred_check
        %p617 = pneg %p290
      $region54: #{_lambda_.1} parent=15 // pred_check_branch
        %619 = sbr.rel (%p617) target = $region56
      $region55: #{_lambda_.1} parent=15 // pred_region
        %p620 = scmp.lt.s32.totalorder %s32, 3
        %s621 = scalar_select %p620, %s32, 3
        %s622 = smul.addr %s621, 2
        %s623 = scalar_lea.vmem %s9, %s622
      $region56: #{_lambda_.1} parent=15 // pred_fallthru
        _
      // Predicated region
      $region57: #{_lambda_.1} parent=15 // pred_check
        %p624 = pneg %p316
      $region58: #{_lambda_.1} parent=15 // pred_check_branch
        %626 = sbr.rel (%p624) target = $region60
      $region59: #{_lambda_.1} parent=15 // pred_region
        %p627 = scmp.lt.s32.totalorder %s32, 3
        %s628 = scalar_select %p627, %s32, 3
        %s629 = smul.addr %s628, 2
        %s630 = smul.addr %s629, 4
        %s631 = scalar_lea.vmem %s10, %s630
      $region60: #{_lambda_.1} parent=15 // pred_fallthru
        _
      // Predicated region
      $region61: #{_lambda_.1} parent=15 // pred_check
        %p632 = pneg %p342
      $region62: #{_lambda_.1} parent=15 // pred_check_branch
        %634 = sbr.rel (%p632) target = $region64
      $region63: #{_lambda_.1} parent=15 // pred_region
        %p635 = scmp.lt.s32.totalorder %s32, 3
        %s636 = scalar_select %p635, %s32, 3
        %s637 = scalar_lea.vmem %s11, %s636
      $region64: #{_lambda_.1} parent=15 // pred_fallthru
        _
      // Predicated region
      $region65: #{_lambda_.1} parent=15 // pred_check
        %p638 = pneg %p368
      $region66: #{_lambda_.1} parent=15 // pred_check_branch
        %640 = sbr.rel (%p638) target = $region68
      $region67: #{_lambda_.1} parent=15 // pred_region
        %p641 = scmp.lt.s32.totalorder %s32, 3
        %s642 = scalar_select %p641, %s32, 3
        %s643 = smul.addr %s642, 4
        %s644 = smul.addr %s643, 4
        %s645 = scalar_lea.vmem %s12, %s644
      $region68: #{_lambda_.1} parent=15 // pred_fallthru
        _
      // Predicated region
      $region69: #{_lambda_.1} parent=15 // pred_check
        %p646 = pneg %p394
      $region70: #{_lambda_.1} parent=15 // pred_check_branch
        %648 = sbr.rel (%p646) target = $region72
      $region71: #{_lambda_.1} parent=15 // pred_region
        %p649 = scmp.lt.s32.totalorder %s32, 3
        %s650 = scalar_select %p649, %s32, 3
        %s651 = smul.addr %s650, 2
        %s652 = scalar_lea.vmem %s13, %s651
      $region72: #{_lambda_.1} parent=15 // pred_fallthru
        _
      // Predicated region
      $region73: #{_lambda_.1} parent=15 // pred_check
        %p653 = pneg %p420
      $region74: #{_lambda_.1} parent=15 // pred_check_branch
        %655 = sbr.rel (%p653) target = $region76
      $region75: #{_lambda_.1} parent=15 // pred_region
        %p656 = scmp.lt.s32.totalorder %s32, 3
        %s657 = scalar_select %p656, %s32, 3
        %s658 = smul.addr %s657, 2
        %s659 = smul.addr %s658, 4
        %s660 = scalar_lea.vmem %s14, %s659
      $region76: #{_lambda_.1} parent=15 // pred_fallthru
        _
      // Predicated region
      $region77: #{_lambda_.1} parent=15 // pred_check
        %p661 = pneg %p446
      $region78: #{_lambda_.1} parent=15 // pred_check_branch
        %663 = sbr.rel (%p661) target = $region80
      $region79: #{_lambda_.1} parent=15 // pred_region
        %p664 = scmp.lt.s32.totalorder %s32, 3
        %s665 = scalar_select %p664, %s32, 3
        %s666 = scalar_lea.vmem %s15, %s665
      $region80: #{_lambda_.1} parent=15 // pred_fallthru
        _
      // Predicated region
      $region81: #{_lambda_.1} parent=15 // pred_check
        %p667 = pneg %p472
      $region82: #{_lambda_.1} parent=15 // pred_check_branch
        %669 = sbr.rel (%p667) target = $region84
      $region83: #{_lambda_.1} parent=15 // pred_region
        %p670 = scmp.lt.s32.totalorder %s32, 3
        %s671 = scalar_select %p670, %s32, 3
        %s672 = smul.addr %s671, 2
        %s673 = smul.addr %s672, 4
        %s674 = scalar_lea.vmem %s16, %s673
      $region84: #{_lambda_.1} parent=15 // pred_fallthru
        _
      // Predicated region
      $region85: #{_lambda_.1} parent=15 // pred_check
        %p675 = pneg %p498
      $region86: #{_lambda_.1} parent=15 // pred_check_branch
        %677 = sbr.rel (%p675) target = $region88
      $region87: #{_lambda_.1} parent=15 // pred_region
        %p678 = scmp.lt.s32.totalorder %s32, 3
        %s679 = scalar_select %p678, %s32, 3
        %s680 = scalar_lea.vmem %s17, %s679
      $region88: #{_lambda_.1} parent=15 // pred_fallthru
        _
    $region16: #{_lambda_.1} parent=5 // pred_fallthru
      _
    %p681 = scmp.le.s32.totalorder 1, %s24
    %p682 = scmp.lt.s32.totalorder %s24, 9
    %p683 = pnand %p681, %p682
    %p684 = pneg %p683
    // Predicated region
    $region89: #{_lambda_.1} parent=5 // pred_check
      _
    $region90: #{_lambda_.1} parent=5 // pred_check_branch
      %686 = sbr.rel (%p683) target = $region92
    $region91: #{_lambda_.1} parent=5 // pred_region
      %s687 = ssub.s32 %s24, 1
      %p688 = scmp.lt.s32.totalorder %s33, 1
      %s689 = scalar_select %p688, %s33, 1
      %s690 = smul.addr %s689, 2
      %s691 = smul.addr %s690, 8
      %s692 = scalar_lea.vmem %s0, %s691
      %p693 = pneg %p62
      %p694 = pneg %p59
      %p695 = scmp.lt.s32.totalorder %s33, 1
      %s696 = scalar_select %p695, %s33, 1
      %s697 = smul.addr %s696, 2
      %s698 = smul.addr %s697, 8
      %s699 = scalar_lea.vmem %s1, %s698
      %p700 = pneg %p88
      %p701 = pneg %p85
      %p702 = scmp.lt.s32.totalorder %s33, 1
      %s703 = scalar_select %p702, %s33, 1
      %s704 = smul.addr %s703, 2
      %s705 = smul.addr %s704, 8
      %s706 = scalar_lea.vmem %s2, %s705
      %p707 = pneg %p114
      %p708 = pneg %p111
      %p709 = scmp.lt.s32.totalorder %s33, 1
      %s710 = scalar_select %p709, %s33, 1
      %s711 = smul.addr %s710, 2
      %s712 = smul.addr %s711, 8
      %s713 = scalar_lea.vmem %s3, %s712
      %p714 = pneg %p140
      %p715 = pneg %p137
      %p716 = scmp.lt.s32.totalorder %s34, 3
      %s717 = scalar_select %p716, %s34, 3
      %s718 = smul.addr %s717, 2
      %s719 = scalar_lea.vmem %s4, %s718
      %p720 = pneg %p166
      %p721 = pneg %p163
      %p722 = scmp.lt.s32.totalorder %s34, 3
      %s723 = scalar_select %p722, %s34, 3
      %s724 = scalar_lea.vmem %s5, %s723
      %p725 = pneg %p192
      %p726 = pneg %p189
      %p727 = scmp.lt.s32.totalorder %s34, 3
      %s728 = scalar_select %p727, %s34, 3
      %s729 = smul.addr %s728, 12
      %s730 = smul.addr %s729, 4
      %s731 = scalar_lea.vmem %s6, %s730
      %p732 = pneg %p218
      %p733 = pneg %p215
      %p734 = scmp.lt.s32.totalorder %s34, 3
      %s735 = scalar_select %p734, %s34, 3
      %s736 = smul.addr %s735, 2
      %s737 = scalar_lea.vmem %s7, %s736
      %p738 = pneg %p244
      %p739 = pneg %p241
      %p740 = scmp.lt.s32.totalorder %s34, 3
      %s741 = scalar_select %p740, %s34, 3
      %s742 = smul.addr %s741, 12
      %s743 = smul.addr %s742, 4
      %s744 = scalar_lea.vmem %s8, %s743
      %p745 = pneg %p270
      %p746 = pneg %p267
      %p747 = scmp.lt.s32.totalorder %s34, 3
      %s748 = scalar_select %p747, %s34, 3
      %s749 = smul.addr %s748, 2
      %s750 = scalar_lea.vmem %s9, %s749
      %p751 = pneg %p296
      %p752 = pneg %p293
      %p753 = scmp.lt.s32.totalorder %s34, 3
      %s754 = scalar_select %p753, %s34, 3
      %s755 = smul.addr %s754, 2
      %s756 = smul.addr %s755, 4
      %s757 = scalar_lea.vmem %s10, %s756
      %p758 = pneg %p322
      %p759 = pneg %p319
      %p760 = scmp.lt.s32.totalorder %s34, 3
      %s761 = scalar_select %p760, %s34, 3
      %s762 = scalar_lea.vmem %s11, %s761
      %p763 = pneg %p348
      %p764 = pneg %p345
      %p765 = scmp.lt.s32.totalorder %s34, 3
      %s766 = scalar_select %p765, %s34, 3
      %s767 = smul.addr %s766, 4
      %s768 = smul.addr %s767, 4
      %s769 = scalar_lea.vmem %s12, %s768
      %p770 = pneg %p374
      %p771 = pneg %p371
      %p772 = scmp.lt.s32.totalorder %s34, 3
      %s773 = scalar_select %p772, %s34, 3
      %s774 = smul.addr %s773, 2
      %s775 = scalar_lea.vmem %s13, %s774
      %p776 = pneg %p400
      %p777 = pneg %p397
      %p778 = scmp.lt.s32.totalorder %s34, 3
      %s779 = scalar_select %p778, %s34, 3
      %s780 = smul.addr %s779, 2
      %s781 = smul.addr %s780, 4
      %s782 = scalar_lea.vmem %s14, %s781
      %p783 = pneg %p426
      %p784 = pneg %p423
      %p785 = scmp.lt.s32.totalorder %s34, 3
      %s786 = scalar_select %p785, %s34, 3
      %s787 = scalar_lea.vmem %s15, %s786
      %p788 = pneg %p452
      %p789 = pneg %p449
      %p790 = scmp.lt.s32.totalorder %s34, 3
      %s791 = scalar_select %p790, %s34, 3
      %s792 = smul.addr %s791, 2
      %s793 = smul.addr %s792, 4
      %s794 = scalar_lea.vmem %s16, %s793
      %p795 = pneg %p478
      %p796 = pneg %p475
      %p797 = scmp.lt.s32.totalorder %s34, 3
      %s798 = scalar_select %p797, %s34, 3
      %s799 = scalar_lea.vmem %s17, %s798
      %p800 = pneg %p504
      %p801 = pneg %p501
      %p802 = pneg %p530
      %p803 = pneg %p527
      %p804 = scmp.lt.s32.totalorder %s33, 1
      %s805 = scalar_select %p804, %s33, 1
      %s806 = smul.addr %s805, 2
      %s807 = smul.addr %s806, 8
      %s808 = scalar_lea.vmem %s18, %s807
      %p809 = scmp.lt.s32.totalorder %s33, 1
      %s810 = scalar_select %p809, %s33, 1
      %s811 = smul.addr %s810, 2
      %s812 = smul.addr %s811, 8
      %s813 = scalar_lea.vmem %s0, %s812
      %p814 = scmp.lt.s32.totalorder %s33, 1
      %s815 = scalar_select %p814, %s33, 1
      %s816 = smul.addr %s815, 2
      %s817 = smul.addr %s816, 8
      %s818 = scalar_lea.vmem %s1, %s817
      %p819 = scmp.lt.s32.totalorder %s33, 1
      %s820 = scalar_select %p819, %s33, 1
      %s821 = smul.addr %s820, 2
      %s822 = smul.addr %s821, 8
      %s823 = scalar_lea.vmem %s2, %s822
      %p824 = scmp.lt.s32.totalorder %s33, 1
      %s825 = scalar_select %p824, %s33, 1
      %s826 = smul.addr %s825, 2
      %s827 = smul.addr %s826, 8
      %s828 = scalar_lea.vmem %s3, %s827
      %p829 = scmp.lt.s32.totalorder %s34, 3
      %s830 = scalar_select %p829, %s34, 3
      %s831 = smul.addr %s830, 2
      %s832 = scalar_lea.vmem %s4, %s831
      %p833 = scmp.lt.s32.totalorder %s34, 3
      %s834 = scalar_select %p833, %s34, 3
      %s835 = scalar_lea.vmem %s5, %s834
      %p836 = scmp.lt.s32.totalorder %s34, 3
      %s837 = scalar_select %p836, %s34, 3
      %s838 = smul.addr %s837, 12
      %s839 = smul.addr %s838, 4
      %s840 = scalar_lea.vmem %s6, %s839
      %p841 = scmp.lt.s32.totalorder %s34, 3
      %s842 = scalar_select %p841, %s34, 3
      %s843 = smul.addr %s842, 2
      %s844 = scalar_lea.vmem %s7, %s843
      %p845 = scmp.lt.s32.totalorder %s34, 3
      %s846 = scalar_select %p845, %s34, 3
      %s847 = smul.addr %s846, 12
      %s848 = smul.addr %s847, 4
      %s849 = scalar_lea.vmem %s8, %s848
      %p850 = scmp.lt.s32.totalorder %s34, 3
      %s851 = scalar_select %p850, %s34, 3
      %s852 = smul.addr %s851, 2
      %s853 = scalar_lea.vmem %s9, %s852
      %p854 = scmp.lt.s32.totalorder %s34, 3
      %s855 = scalar_select %p854, %s34, 3
      %s856 = smul.addr %s855, 2
      %s857 = smul.addr %s856, 4
      %s858 = scalar_lea.vmem %s10, %s857
      %p859 = scmp.lt.s32.totalorder %s34, 3
      %s860 = scalar_select %p859, %s34, 3
      %s861 = scalar_lea.vmem %s11, %s860
      %p862 = scmp.lt.s32.totalorder %s34, 3
      %s863 = scalar_select %p862, %s34, 3
      %s864 = smul.addr %s863, 4
      %s865 = smul.addr %s864, 4
      %s866 = scalar_lea.vmem %s12, %s865
      %p867 = scmp.lt.s32.totalorder %s34, 3
      %s868 = scalar_select %p867, %s34, 3
      %s869 = smul.addr %s868, 2
      %s870 = scalar_lea.vmem %s13, %s869
      %p871 = scmp.lt.s32.totalorder %s34, 3
      %s872 = scalar_select %p871, %s34, 3
      %s873 = smul.addr %s872, 2
      %s874 = smul.addr %s873, 4
      %s875 = scalar_lea.vmem %s14, %s874
      %p876 = scmp.lt.s32.totalorder %s34, 3
      %s877 = scalar_select %p876, %s34, 3
      %s878 = scalar_lea.vmem %s15, %s877
      %p879 = scmp.lt.s32.totalorder %s34, 3
      %s880 = scalar_select %p879, %s34, 3
      %s881 = smul.addr %s880, 2
      %s882 = smul.addr %s881, 4
      %s883 = scalar_lea.vmem %s16, %s882
      %p884 = scmp.lt.s32.totalorder %s34, 3
      %s885 = scalar_select %p884, %s34, 3
      %s886 = scalar_lea.vmem %s17, %s885
      %p887 = scmp.lt.s32.totalorder %s33, 1
      %s888 = scalar_select %p887, %s33, 1
      %s889 = smul.addr %s888, 2
      %s890 = smul.addr %s889, 8
      %s891 = scalar_lea.vmem %s18, %s890
      %v893 = vld [vmem:[%s828] sm:$0xff]
      %v894 = vld [vmem:[%s828 + $0x8] sm:$0xff]
      %p895 = scmp.eq.s32.totalorder %s34, 0
      // Predicated region
      $region93: #{_lambda_.1} parent=91 // pred_check
        %p896 = pneg %p895
      $region94: #{_lambda_.1} parent=91 // pred_check_branch
        %898 = sbr.rel (%p896) target = $region96
      $region95: #{_lambda_.1} parent=91 // pred_region
        %v899 = vld [vmem:[%s813] sm:$0xff]
        %v900 = vld [vmem:[%s813 + $0x8] sm:$0xff]
        %v901 = vld [vmem:[%s818] sm:$0xff]
        %v902 = vld [vmem:[%s818 + $0x8] sm:$0xff]
        %v903 = vld [vmem:[%s823] sm:$0xff]
        %v904 = vld [vmem:[%s823 + $0x8] sm:$0xff]
        %vm905 = vcmask 31744
        %906 = vst.msk [vmem:[#allocation2] sm:$0xff] %vm905, %v899
        %907 = vst.msk [vmem:[#allocation2 + $0x8] sm:$0xff] %vm905, %v900
        %910 = vrot.lane.b32.xlu0 %v899, 124
        %v911 = vpop.permute.xlu0 %910
        %912 = vrot.lane.b32.xlu0 %v900, 124
        %v913 = vpop.permute.xlu0 %912
        %s916 = scalar_lea.vmem [#allocation2], 16
        %917 = vst.msk [vmem:[%s916] sm:$0xff] %vm905, %v911
        %918 = vst.msk [vmem:[%s916 + $0x8] sm:$0xff] %vm905, %v913
        %919 = vst.msk [vmem:[#allocation3] sm:$0xff] %vm905, %v901
        %920 = vst.msk [vmem:[#allocation3 + $0x8] sm:$0xff] %vm905, %v902
        %923 = vrot.lane.b32.xlu0 %v901, 124
        %v924 = vpop.permute.xlu0 %923
        %925 = vrot.lane.b32.xlu0 %v902, 124
        %v926 = vpop.permute.xlu0 %925
        %s929 = scalar_lea.vmem [#allocation3], 16
        %930 = vst.msk [vmem:[%s929] sm:$0xff] %vm905, %v924
        %931 = vst.msk [vmem:[%s929 + $0x8] sm:$0xff] %vm905, %v926
        %932 = vst.msk [vmem:[#allocation4] sm:$0xff] %vm905, %v903
        %933 = vst.msk [vmem:[#allocation4 + $0x8] sm:$0xff] %vm905, %v904
        %936 = vrot.lane.b32.xlu0 %v903, 124
        %v937 = vpop.permute.xlu0 %936
        %938 = vrot.lane.b32.xlu0 %v904, 124
        %v939 = vpop.permute.xlu0 %938
        %s942 = scalar_lea.vmem [#allocation4], 16
        %943 = vst.msk [vmem:[%s942] sm:$0xff] %vm905, %v937
        %944 = vst.msk [vmem:[%s942 + $0x8] sm:$0xff] %vm905, %v939
        %vm945 = vcmask 125952
        %946 = vst.msk [vmem:[#allocation6] sm:$0xf] %vm945, 0
        %947 = vst.msk [vmem:[#allocation6 + $0xc] sm:$0xf] %vm945, 0
      $region96: #{_lambda_.1} parent=91 // pred_fallthru
        _
      %p948 = scmp.lt.s32.totalorder %s34, 0
      %s949 = ssub.s32 0, %s34
      %s950 = scalar_select %p948, %s949, %s34
      %s951 = sand.u32 %s950, 1
      %s952 = ssub.s32 0, %s951
      %s953 = scalar_select %p948, %s952, %s951
      %p954 = scmp.ne.s32.totalorder %s953, 0
      %p955 = scmp.lt.s32.totalorder %s953, 0
      %p956 = pnand %p955, %p954
      %p957 = pneg %p956
      %s958 = sadd.s32 %s953, 2
      %s959 = scalar_select %p957, %s958, %s953
      %p960 = scmp.eq.s32.totalorder %s959, 0
      %v961 = vld [vmem:[#allocation2] sm:$0xff]
      %v962 = vld [vmem:[#allocation2 + $0x8] sm:$0xff]
      %s963 = scalar_lea.vmem [#allocation2], 16
      %v964 = vld [vmem:[%s963] sm:$0xff]
      %v965 = vld [vmem:[%s963 + $0x8] sm:$0xff]
      %s966 = scalar_select %p960, 1, 0
      %v967 = vstv %s966
      %vm968 = vcmp.eq.s32.totalorder %v967, 1
      %v969 = vsel %vm968, %v961, %v964
      %v970 = vsel %vm968, %v962, %v965
      %v971 = vpack.c.bf16 %v970, %v969
      %v972 = vld [vmem:[%s832] sm:$0x3]
      %v973 = vld [vmem:[%s835] sm:$0x1]
      %v975 = vperm.slane %v973, 0
      %vm977 = vcmask 31744
      %v979 = vsel %vm977, %v971, 0
      %vm981 = vcmask 1041408
      %v983 = vsel %vm981, %v972, 0
      %985 = vmatpush.bf16.msra.mxu0 0
      %986 = vmatpush.bf16.msra.mxu0 0
      %987 = vmatpush.bf16.msra.mxu0 0
      %988 = vmatpush.bf16.msra.mxu0 0
      %989 = vmatpush.bf16.msra.mxu0 0
      %990 = vmatpush.bf16.msra.mxu0 0
      %991 = vmatpush.bf16.msra.mxu0 0
      %992 = vmatpush.bf16.msra.mxu0 %v983
      %993 = vmatmul.bf16.gmra.mxu0 %v979
      %v994 = vpop.f32.mrf.mxu0
      %v995 = vadd.f32 %v975, %v994
      %v996 = vpop.f32.mrf.mxu0
      %v997 = vadd.f32 %v975, %v996
      %998 = vdwg.mxu0
      %1000 = vset.pattern.permute.xlu0 0
      %1001 = vperm.xlu0 %1000, %v893
      %v1002 = vpop.permute.xlu0 %1001
      %1005 = vset.pattern.permute.xlu0 0
      %1006 = vperm.xlu0 %1005, %v894
      %v1007 = vpop.permute.xlu0 %1006
      %v1009 = vmul.f32 %v995, %v1002
      %v1010 = vmul.f32 %v997, %v1007
      %vm1011 = vcmask 130048
      %1012 = vst.msk [vmem:[#allocation5] sm:$0xff] %vm1011, %v1009
      %1013 = vst.msk [vmem:[#allocation5 + $0x8] sm:$0xff] %vm1011, %v1010
      %v1014 = vpack.c.bf16 %v1009, %v1009
      %v1015 = vpack.c.bf16 %v1010, %v1010
      %vm1016 = vcmask 125952
      %1017 = vst.msk [vmem:[#allocation6 + $0x4] sm:$0xf] %vm1016, %v1014
      %1018 = vst.msk [vmem:[#allocation6 + $0x8] sm:$0xf] %vm1016, %v1015
      %v1019 = vld [vmem:[#allocation6] sm:$0x8]
      %v1020 = vld [vmem:[#allocation6 + $0x4] sm:$0xf]
      %v1021 = vld [vmem:[#allocation6 + $0x8] sm:$0xf]
      %v1022 = vld [vmem:[%s840] sm:$0xf]
      %v1023 = vld [vmem:[%s840 + $0x4] sm:$0xf]
      %v1024 = vld [vmem:[%s849] sm:$0xf]
      %v1025 = vld [vmem:[%s849 + $0x4] sm:$0xf]
      %s1026 = scalar_lea.vmem %s840, 8
      %v1027 = vld [vmem:[%s1026] sm:$0xf]
      %v1028 = vld [vmem:[%s1026 + $0x4] sm:$0xf]
      %v1031 = vunpack.c.l.b16 %v1020
      %v1032 = vunpack.c.l.b16 %v1021
      %v1033 = vpack.c.b16 %v1032, %v1031
      %v1036 = vunpack.c.l.b16 %v1027
      %v1037 = vunpack.c.l.b16 %v1028
      %v1038 = vpack.c.b16 %v1037, %v1036
      %v1041 = vsel %vm1011, %v1033, 0
      %1043 = vmatpush.bf16.msra.mxu0 0
      %1044 = vmatpush.bf16.msra.mxu0 0
      %1045 = vmatpush.bf16.msra.mxu0 0
      %1046 = vmatpush.bf16.msra.mxu0 0
      %1047 = vmatpush.bf16.msra.mxu0 0
      %1048 = vmatpush.bf16.msra.mxu0 0
      %1049 = vmatpush.bf16.msra.mxu0 0
      %1050 = vmatpush.bf16.msra.mxu0 %v1038
      %1051 = vmatmul.bf16.gmra.mxu0 %v1041
      %v1052 = vpop.f32.mrf.mxu0
      %v1053 = vadd.f32 0.0, %v1052
      %v1054 = vpop.f32.mrf.mxu0
      %v1055 = vadd.f32 0.0, %v1054
      %1056 = vdwg.mxu0
      %s1057 = scalar_lea.vmem %s849, 8
      %v1058 = vld [vmem:[%s1057] sm:$0xf]
      %v1059 = vld [vmem:[%s1057 + $0x4] sm:$0xf]
      %v1062 = vunpack.c.l.b16 %v1058
      %v1063 = vunpack.c.l.b16 %v1059
      %v1064 = vpack.c.b16 %v1063, %v1062
      %1066 = vmatpush.bf16.msra.mxu0 0
      %1067 = vmatpush.bf16.msra.mxu0 0
      %1068 = vmatpush.bf16.msra.mxu0 0
      %1069 = vmatpush.bf16.msra.mxu0 0
      %1070 = vmatpush.bf16.msra.mxu0 0
      %1071 = vmatpush.bf16.msra.mxu0 0
      %1072 = vmatpush.bf16.msra.mxu0 0
      %1073 = vmatpush.bf16.msra.mxu0 %v1064
      %1074 = vmatmul.bf16.gmra.mxu0 %v1041
      %v1075 = vpop.f32.mrf.mxu0
      %v1076 = vadd.f32 0.0, %v1075
      %v1077 = vpop.f32.mrf.mxu0
      %v1078 = vadd.f32 0.0, %v1077
      %1079 = vdwg.mxu0
      %v1081 = vunpack.c.l.b16 %v1019
      %v1082 = vpack.c.b16 %v1031, %v1081
      %v1083 = vpack.c.b16 %v1032, %v1032
      %vm1084 = vsmask.f32 4352
      %v1086 = vshrl.u32 %v1082, 16
      %v1088 = vrot.slane %v1086, 3
      %v1089 = vshll.u32 %v1082, 16
      %v1091 = vrot.slane %v1089, 4
      %v1092 = vor.u32 %v1088, %v1091
      %v1094 = vshrl.u32 %v1083, 16
      %v1096 = vrot.slane %v1094, 3
      %v1097 = vshll.u32 %v1083, 16
      %v1099 = vrot.slane %v1097, 4
      %v1100 = vor.u32 %v1096, %v1099
      %v1101 = vsel %vm1084, %v1092, %v1100
      %v1104 = vunpack.c.l.b16 %v1022
      %v1105 = vunpack.c.l.b16 %v1023
      %v1106 = vpack.c.b16 %v1105, %v1104
      %v1109 = vsel %vm1011, %v1101, 0
      %1111 = vmatpush.bf16.msra.mxu0 0
      %1112 = vmatpush.bf16.msra.mxu0 0
      %1113 = vmatpush.bf16.msra.mxu0 0
      %1114 = vmatpush.bf16.msra.mxu0 0
      %1115 = vmatpush.bf16.msra.mxu0 0
      %1116 = vmatpush.bf16.msra.mxu0 0
      %1117 = vmatpush.bf16.msra.mxu0 0
      %1118 = vmatpush.bf16.msra.mxu0 %v1106
      %1119 = vmatmul.bf16.gmra.mxu0 %v1109
      %v1120 = vpop.f32.mrf.mxu0
      %v1121 = vadd.f32 %v1053, %v1120
      %v1122 = vpop.f32.mrf.mxu0
      %v1123 = vadd.f32 %v1055, %v1122
      %1124 = vdwg.mxu0
      %v1127 = vunpack.c.l.b16 %v1024
      %v1128 = vunpack.c.l.b16 %v1025
      %v1129 = vpack.c.b16 %v1128, %v1127
      %1131 = vmatpush.bf16.msra.mxu0 0
      %1132 = vmatpush.bf16.msra.mxu0 0
      %1133 = vmatpush.bf16.msra.mxu0 0
      %1134 = vmatpush.bf16.msra.mxu0 0
      %1135 = vmatpush.bf16.msra.mxu0 0
      %1136 = vmatpush.bf16.msra.mxu0 0
      %1137 = vmatpush.bf16.msra.mxu0 0
      %1138 = vmatpush.bf16.msra.mxu0 %v1129
      %1139 = vmatmul.bf16.gmra.mxu0 %v1109
      %v1140 = vpop.f32.mrf.mxu0
      %v1141 = vadd.f32 %v1076, %v1140
      %v1142 = vpop.f32.mrf.mxu0
      %v1143 = vadd.f32 %v1078, %v1142
      %1144 = vdwg.mxu0
      %v1145 = vld [vmem:[#allocation6 + $0x4] sm:$0xf]
      %v1146 = vld [vmem:[#allocation6 + $0x8] sm:$0xf]
      %v1147 = vld [vmem:[#allocation6 + $0xc] sm:$0x1]
      %s1148 = scalar_lea.vmem %s840, 16
      %v1149 = vld [vmem:[%s1148] sm:$0xf]
      %v1150 = vld [vmem:[%s1148 + $0x4] sm:$0xf]
      %v1154 = vunpack.c.l.b16 %v1145
      %v1155 = vunpack.c.l.b16 %v1146
      %v1156 = vunpack.c.l.b16 %v1147
      %v1157 = vpack.c.b16 %v1155, %v1154
      %v1158 = vpack.c.b16 %v1156, %v1156
      %vm1159 = vsmask.f32 7424
      %v1161 = vshrl.u32 %v1157, 16
      %v1163 = vshll.u32 %v1157, 16
      %v1165 = vrot.slane %v1163, 1
      %v1166 = vor.u32 %v1161, %v1165
      %v1168 = vshll.u32 %v1158, 16
      %v1170 = vrot.slane %v1168, 1
      %v1171 = vsel %vm1159, %v1166, %v1170
      %v1174 = vunpack.c.l.b16 %v1149
      %v1175 = vunpack.c.l.b16 %v1150
      %v1176 = vpack.c.b16 %v1175, %v1174
      %v1179 = vsel %vm1011, %v1171, 0
      %1181 = vmatpush.bf16.msra.mxu0 0
      %1182 = vmatpush.bf16.msra.mxu0 0
      %1183 = vmatpush.bf16.msra.mxu0 0
      %1184 = vmatpush.bf16.msra.mxu0 0
      %1185 = vmatpush.bf16.msra.mxu0 0
      %1186 = vmatpush.bf16.msra.mxu0 0
      %1187 = vmatpush.bf16.msra.mxu0 0
      %1188 = vmatpush.bf16.msra.mxu0 %v1176
      %1189 = vmatmul.bf16.gmra.mxu0 %v1179
      %v1190 = vpop.f32.mrf.mxu0
      %v1191 = vadd.f32 0.0, %v1190
      %v1192 = vpop.f32.mrf.mxu0
      %v1193 = vadd.f32 0.0, %v1192
      %1194 = vdwg.mxu0
      %s1195 = scalar_lea.vmem %s849, 16
      %v1196 = vld [vmem:[%s1195] sm:$0xf]
      %v1197 = vld [vmem:[%s1195 + $0x4] sm:$0xf]
      %v1200 = vunpack.c.l.b16 %v1196
      %v1201 = vunpack.c.l.b16 %v1197
      %v1202 = vpack.c.b16 %v1201, %v1200
      %1204 = vmatpush.bf16.msra.mxu0 0
      %1205 = vmatpush.bf16.msra.mxu0 0
      %1206 = vmatpush.bf16.msra.mxu0 0
      %1207 = vmatpush.bf16.msra.mxu0 0
      %1208 = vmatpush.bf16.msra.mxu0 0
      %1209 = vmatpush.bf16.msra.mxu0 0
      %1210 = vmatpush.bf16.msra.mxu0 0
      %1211 = vmatpush.bf16.msra.mxu0 %v1202
      %1212 = vmatmul.bf16.gmra.mxu0 %v1179
      %v1213 = vpop.f32.mrf.mxu0
      %v1214 = vadd.f32 0.0, %v1213
      %v1215 = vpop.f32.mrf.mxu0
      %v1216 = vadd.f32 0.0, %v1215
      %1217 = vdwg.mxu0
      %v1218 = vadd.f32 %v1121, %v1191
      %v1219 = vadd.f32 %v1123, %v1193
      %v1220 = vadd.f32 %v1141, %v1214
      %v1221 = vadd.f32 %v1143, %v1216
      %v1222 = vld [vmem:[%s844] sm:$0x1]
      %v1224 = vperm.slane %v1222, 0
      %v1226 = vadd.f32 %v1218, %v1224
      %v1227 = vadd.f32 %v1219, %v1224
      %v1228 = vtanh.pop %v1226
      %v1229 = vtanh.pop %v1227
      %v1230 = vld [vmem:[%s853] sm:$0x1]
      %v1232 = vperm.slane %v1230, 0
      %v1234 = vadd.f32 %v1220, %v1232
      %v1235 = vadd.f32 %v1221, %v1232
      %v1236 = vxor.u32 %v1234, 2147483648
      %v1237 = vxor.u32 %v1235, 2147483648
      %v1238 = vmul.f32 %v1236, 1.442695
      %v1239 = vpow.pop %v1238
      %v1240 = vmul.f32 %v1237, 1.442695
      %v1241 = vpow.pop %v1240
      %v1242 = vadd.f32 %v1239, 1.0
      %v1243 = vadd.f32 %v1241, 1.0
      %v1244 = vrcp.pop %v1242
      %v1245 = vmul.f32 %v1242, %v1244
      %v1246 = vsub.f32 1.0, %v1245
      %v1247 = vmul.f32 %v1244, %v1246
      %v1248 = vadd.f32 %v1244, %v1247
      %vm1249 = vweird.f32 %v1242
      %vm1250 = vweird.f32 %v1244
      %vm1251 = vmor %vm1249, %vm1250
      %v1252 = vsel %vm1251, %v1244, %v1248
      %v1253 = vand.u32 2147483647, %v1242
      %vm1254 = vcmp.eq.f32.partialorder %v1253, 8.507059e+37
      %v1255 = vand.u32 %v1242, 2147483648
      %v1256 = vor.u32 1.1754944e-38, %v1255
      %v1257 = vsel %vm1254, %v1256, %v1252
      %v1258 = vmul.f32 1.0, %v1257
      %v1259 = vrcp.pop %v1243
      %v1260 = vmul.f32 %v1243, %v1259
      %v1261 = vsub.f32 1.0, %v1260
      %v1262 = vmul.f32 %v1259, %v1261
      %v1263 = vadd.f32 %v1259, %v1262
      %vm1264 = vweird.f32 %v1243
      %vm1265 = vweird.f32 %v1259
      %vm1266 = vmor %vm1264, %vm1265
      %v1267 = vsel %vm1266, %v1259, %v1263
      %v1268 = vand.u32 2147483647, %v1243
      %vm1269 = vcmp.eq.f32.partialorder %v1268, 8.507059e+37
      %v1270 = vand.u32 %v1243, 2147483648
      %v1271 = vor.u32 1.1754944e-38, %v1270
      %v1272 = vsel %vm1269, %v1271, %v1267
      %v1273 = vmul.f32 1.0, %v1272
      %v1274 = vmul.f32 %v1228, %v1258
      %v1275 = vmul.f32 %v1229, %v1273
      %v1276 = vpack.c.bf16 %v1275, %v1274
      %v1277 = vld [vmem:[%s866] sm:$0xf]
      %v1278 = vld [vmem:[%s866 + $0x4] sm:$0xf]
      %v1279 = vld [vmem:[%s870] sm:$0x1]
      %v1281 = vperm.slane %v1279, 0
      %v1285 = vunpack.c.l.b16 %v1277
      %v1286 = vunpack.c.l.b16 %v1278
      %v1287 = vpack.c.b16 %v1286, %v1285
      %v1290 = vsel %vm1011, %v1276, 0
      %1292 = vmatpush.bf16.msra.mxu0 0
      %1293 = vmatpush.bf16.msra.mxu0 0
      %1294 = vmatpush.bf16.msra.mxu0 0
      %1295 = vmatpush.bf16.msra.mxu0 0
      %1296 = vmatpush.bf16.msra.mxu0 0
      %1297 = vmatpush.bf16.msra.mxu0 0
      %1298 = vmatpush.bf16.msra.mxu0 0
      %1299 = vmatpush.bf16.msra.mxu0 %v1287
      %1300 = vmatmul.bf16.gmra.mxu0 %v1290
      %v1301 = vpop.f32.mrf.mxu0
      %v1302 = vadd.f32 %v1281, %v1301
      %v1303 = vpop.f32.mrf.mxu0
      %v1304 = vadd.f32 %v1281, %v1303
      %1305 = vdwg.mxu0
      %1306 = vst.msk [vmem:[#allocation7] sm:$0xff] %vm1011, %v1302
      %1307 = vst.msk [vmem:[#allocation7 + $0x8] sm:$0xff] %vm1011, %v1304
      %v1308 = vld [vmem:[%s858] sm:$0xf]
      %v1309 = vld [vmem:[%s858 + $0x4] sm:$0xf]
      %v1310 = vld [vmem:[%s861] sm:$0x1]
      %v1312 = vperm.slane %v1310, 0
      %v1316 = vunpack.c.l.b16 %v1308
      %v1317 = vunpack.c.l.b16 %v1309
      %v1318 = vpack.c.b16 %v1317, %v1316
      %1320 = vmatpush.bf16.msra.mxu0 0
      %1321 = vmatpush.bf16.msra.mxu0 0
      %1322 = vmatpush.bf16.msra.mxu0 0
      %1323 = vmatpush.bf16.msra.mxu0 0
      %1324 = vmatpush.bf16.msra.mxu0 0
      %1325 = vmatpush.bf16.msra.mxu0 0
      %1326 = vmatpush.bf16.msra.mxu0 0
      %1327 = vmatpush.bf16.msra.mxu0 %v1318
      %1328 = vmatmul.bf16.gmra.mxu0 %v1290
      %v1329 = vpop.f32.mrf.mxu0
      %v1330 = vadd.f32 %v1312, %v1329
      %v1331 = vpop.f32.mrf.mxu0
      %v1332 = vadd.f32 %v1312, %v1331
      %1333 = vdwg.mxu0
      %v1334 = vld [vmem:[#allocation5] sm:$0xff]
      %v1335 = vld [vmem:[#allocation5 + $0x8] sm:$0xff]
      %v1336 = vadd.f32 %v1334, %v1330
      %v1337 = vadd.f32 %v1335, %v1332
      %v1338 = vmul.f32 %v1336, %v1002
      %v1339 = vmul.f32 %v1337, %v1007
      %1340 = vst.msk [vmem:[#allocation5] sm:$0xff] %vm1011, %v1338
      %1341 = vst.msk [vmem:[#allocation5 + $0x8] sm:$0xff] %vm1011, %v1339
      %v1342 = vpack.c.bf16 %v1338, %v1338
      %v1343 = vpack.c.bf16 %v1339, %v1339
      %1344 = vst.msk [vmem:[#allocation6 + $0x4] sm:$0xf] %vm1016, %v1342
      %1345 = vst.msk [vmem:[#allocation6 + $0x8] sm:$0xf] %vm1016, %v1343
      %v1346 = vld [vmem:[#allocation6] sm:$0x8]
      %v1347 = vld [vmem:[#allocation6 + $0x4] sm:$0xf]
      %v1348 = vld [vmem:[#allocation6 + $0x8] sm:$0x7]
      %s1349 = scalar_lea.vmem %s840, 24
      %v1350 = vld [vmem:[%s1349] sm:$0xf]
      %v1351 = vld [vmem:[%s1349 + $0x4] sm:$0xf]
      %s1352 = scalar_lea.vmem %s849, 24
      %v1353 = vld [vmem:[%s1352] sm:$0xf]
      %v1354 = vld [vmem:[%s1352 + $0x4] sm:$0xf]
      %v1355 = vld [vmem:[#allocation6 + $0x8] sm:$0xf]
      %s1356 = scalar_lea.vmem %s840, 32
      %v1357 = vld [vmem:[%s1356] sm:$0xf]
      %v1358 = vld [vmem:[%s1356 + $0x4] sm:$0xf]
      %v1361 = vunpack.c.l.b16 %v1347
      %v1362 = vunpack.c.l.b16 %v1355
      %v1363 = vpack.c.b16 %v1362, %v1361
      %v1366 = vunpack.c.l.b16 %v1357
      %v1367 = vunpack.c.l.b16 %v1358
      %v1368 = vpack.c.b16 %v1367, %v1366
      %v1371 = vsel %vm1011, %v1363, 0
      %1373 = vmatpush.bf16.msra.mxu0 0
      %1374 = vmatpush.bf16.msra.mxu0 0
      %1375 = vmatpush.bf16.msra.mxu0 0
      %1376 = vmatpush.bf16.msra.mxu0 0
      %1377 = vmatpush.bf16.msra.mxu0 0
      %1378 = vmatpush.bf16.msra.mxu0 0
      %1379 = vmatpush.bf16.msra.mxu0 0
      %1380 = vmatpush.bf16.msra.mxu0 %v1368
      %1381 = vmatmul.bf16.gmra.mxu0 %v1371
      %v1382 = vpop.f32.mrf.mxu0
      %v1383 = vadd.f32 0.0, %v1382
      %v1384 = vpop.f32.mrf.mxu0
      %v1385 = vadd.f32 0.0, %v1384
      %1386 = vdwg.mxu0
      %s1387 = scalar_lea.vmem %s849, 32
      %v1388 = vld [vmem:[%s1387] sm:$0xf]
      %v1389 = vld [vmem:[%s1387 + $0x4] sm:$0xf]
      %v1392 = vunpack.c.l.b16 %v1388
      %v1393 = vunpack.c.l.b16 %v1389
      %v1394 = vpack.c.b16 %v1393, %v1392
      %1396 = vmatpush.bf16.msra.mxu0 0
      %1397 = vmatpush.bf16.msra.mxu0 0
      %1398 = vmatpush.bf16.msra.mxu0 0
      %1399 = vmatpush.bf16.msra.mxu0 0
      %1400 = vmatpush.bf16.msra.mxu0 0
      %1401 = vmatpush.bf16.msra.mxu0 0
      %1402 = vmatpush.bf16.msra.mxu0 0
      %1403 = vmatpush.bf16.msra.mxu0 %v1394
      %1404 = vmatmul.bf16.gmra.mxu0 %v1371
      %v1405 = vpop.f32.mrf.mxu0
      %v1406 = vadd.f32 0.0, %v1405
      %v1407 = vpop.f32.mrf.mxu0
      %v1408 = vadd.f32 0.0, %v1407
      %1409 = vdwg.mxu0
      %v1412 = vunpack.c.l.b16 %v1346
      %v1413 = vunpack.c.l.b16 %v1348
      %v1414 = vpack.c.b16 %v1361, %v1412
      %v1415 = vpack.c.b16 %v1413, %v1413
      %vm1416 = vcmask 1044480
      %v1417 = vrot.slane %v1414, 3
      %v1418 = vrot.slane %v1415, 3
      %v1419 = vsel %vm1416, %v1417, %v1418
      %v1422 = vunpack.c.l.b16 %v1350
      %v1423 = vunpack.c.l.b16 %v1351
      %v1424 = vpack.c.b16 %v1423, %v1422
      %v1427 = vsel %vm1011, %v1419, 0
      %1429 = vmatpush.bf16.msra.mxu0 0
      %1430 = vmatpush.bf16.msra.mxu0 0
      %1431 = vmatpush.bf16.msra.mxu0 0
      %1432 = vmatpush.bf16.msra.mxu0 0
      %1433 = vmatpush.bf16.msra.mxu0 0
      %1434 = vmatpush.bf16.msra.mxu0 0
      %1435 = vmatpush.bf16.msra.mxu0 0
      %1436 = vmatpush.bf16.msra.mxu0 %v1424
      %1437 = vmatmul.bf16.gmra.mxu0 %v1427
      %v1438 = vpop.f32.mrf.mxu0
      %v1439 = vadd.f32 %v1383, %v1438
      %v1440 = vpop.f32.mrf.mxu0
      %v1441 = vadd.f32 %v1385, %v1440
      %1442 = vdwg.mxu0
      %v1445 = vunpack.c.l.b16 %v1353
      %v1446 = vunpack.c.l.b16 %v1354
      %v1447 = vpack.c.b16 %v1446, %v1445
      %1449 = vmatpush.bf16.msra.mxu0 0
      %1450 = vmatpush.bf16.msra.mxu0 0
      %1451 = vmatpush.bf16.msra.mxu0 0
      %1452 = vmatpush.bf16.msra.mxu0 0
      %1453 = vmatpush.bf16.msra.mxu0 0
      %1454 = vmatpush.bf16.msra.mxu0 0
      %1455 = vmatpush.bf16.msra.mxu0 0
      %1456 = vmatpush.bf16.msra.mxu0 %v1447
      %1457 = vmatmul.bf16.gmra.mxu0 %v1427
      %v1458 = vpop.f32.mrf.mxu0
      %v1459 = vadd.f32 %v1406, %v1458
      %v1460 = vpop.f32.mrf.mxu0
      %v1461 = vadd.f32 %v1408, %v1460
      %1462 = vdwg.mxu0
      %v1463 = vld [vmem:[#allocation6 + $0x4] sm:$0xe]
      %v1464 = vld [vmem:[#allocation6 + $0x8] sm:$0xf]
      %v1465 = vld [vmem:[#allocation6 + $0xc] sm:$0x1]
      %s1466 = scalar_lea.vmem %s840, 40
      %v1467 = vld [vmem:[%s1466] sm:$0xf]
      %v1468 = vld [vmem:[%s1466 + $0x4] sm:$0xf]
      %v1472 = vunpack.c.l.b16 %v1463
      %v1473 = vunpack.c.l.b16 %v1464
      %v1474 = vunpack.c.l.b16 %v1465
      %v1475 = vpack.c.b16 %v1473, %v1472
      %v1476 = vpack.c.b16 %v1474, %v1474
      %vm1477 = vcmask 1046528
      %v1478 = vrot.slane %v1475, 1
      %v1479 = vrot.slane %v1476, 1
      %v1480 = vsel %vm1477, %v1478, %v1479
      %v1483 = vunpack.c.l.b16 %v1467
      %v1484 = vunpack.c.l.b16 %v1468
      %v1485 = vpack.c.b16 %v1484, %v1483
      %v1488 = vsel %vm1011, %v1480, 0
      %1490 = vmatpush.bf16.msra.mxu0 0
      %1491 = vmatpush.bf16.msra.mxu0 0
      %1492 = vmatpush.bf16.msra.mxu0 0
      %1493 = vmatpush.bf16.msra.mxu0 0
      %1494 = vmatpush.bf16.msra.mxu0 0
      %1495 = vmatpush.bf16.msra.mxu0 0
      %1496 = vmatpush.bf16.msra.mxu0 0
      %1497 = vmatpush.bf16.msra.mxu0 %v1485
      %1498 = vmatmul.bf16.gmra.mxu0 %v1488
      %v1499 = vpop.f32.mrf.mxu0
      %v1500 = vadd.f32 0.0, %v1499
      %v1501 = vpop.f32.mrf.mxu0
      %v1502 = vadd.f32 0.0, %v1501
      %1503 = vdwg.mxu0
      %s1504 = scalar_lea.vmem %s849, 40
      %v1505 = vld [vmem:[%s1504] sm:$0xf]
      %v1506 = vld [vmem:[%s1504 + $0x4] sm:$0xf]
      %v1509 = vunpack.c.l.b16 %v1505
      %v1510 = vunpack.c.l.b16 %v1506
      %v1511 = vpack.c.b16 %v1510, %v1509
      %1513 = vmatpush.bf16.msra.mxu0 0
      %1514 = vmatpush.bf16.msra.mxu0 0
      %1515 = vmatpush.bf16.msra.mxu0 0
      %1516 = vmatpush.bf16.msra.mxu0 0
      %1517 = vmatpush.bf16.msra.mxu0 0
      %1518 = vmatpush.bf16.msra.mxu0 0
      %1519 = vmatpush.bf16.msra.mxu0 0
      %1520 = vmatpush.bf16.msra.mxu0 %v1511
      %1521 = vmatmul.bf16.gmra.mxu0 %v1488
      %v1522 = vpop.f32.mrf.mxu0
      %v1523 = vadd.f32 0.0, %v1522
      %v1524 = vpop.f32.mrf.mxu0
      %v1525 = vadd.f32 0.0, %v1524
      %1526 = vdwg.mxu0
      %v1527 = vadd.f32 %v1439, %v1500
      %v1528 = vadd.f32 %v1441, %v1502
      %v1529 = vadd.f32 %v1459, %v1523
      %v1530 = vadd.f32 %v1461, %v1525
      %s1531 = scalar_lea.vmem %s844, 1
      %v1532 = vld [vmem:[%s1531] sm:$0x1]
      %v1534 = vperm.slane %v1532, 0
      %v1536 = vadd.f32 %v1527, %v1534
      %v1537 = vadd.f32 %v1528, %v1534
      %v1538 = vtanh.pop %v1536
      %v1539 = vtanh.pop %v1537
      %s1540 = scalar_lea.vmem %s853, 1
      %v1541 = vld [vmem:[%s1540] sm:$0x1]
      %v1543 = vperm.slane %v1541, 0
      %v1545 = vadd.f32 %v1529, %v1543
      %v1546 = vadd.f32 %v1530, %v1543
      %v1547 = vxor.u32 %v1545, 2147483648
      %v1548 = vxor.u32 %v1546, 2147483648
      %v1549 = vmul.f32 %v1547, 1.442695
      %v1550 = vpow.pop %v1549
      %v1551 = vmul.f32 %v1548, 1.442695
      %v1552 = vpow.pop %v1551
      %v1553 = vadd.f32 %v1550, 1.0
      %v1554 = vadd.f32 %v1552, 1.0
      %v1555 = vrcp.pop %v1553
      %v1556 = vmul.f32 %v1553, %v1555
      %v1557 = vsub.f32 1.0, %v1556
      %v1558 = vmul.f32 %v1555, %v1557
      %v1559 = vadd.f32 %v1555, %v1558
      %vm1560 = vweird.f32 %v1553
      %vm1561 = vweird.f32 %v1555
      %vm1562 = vmor %vm1560, %vm1561
      %v1563 = vsel %vm1562, %v1555, %v1559
      %v1564 = vand.u32 2147483647, %v1553
      %vm1565 = vcmp.eq.f32.partialorder %v1564, 8.507059e+37
      %v1566 = vand.u32 %v1553, 2147483648
      %v1567 = vor.u32 1.1754944e-38, %v1566
      %v1568 = vsel %vm1565, %v1567, %v1563
      %v1569 = vmul.f32 1.0, %v1568
      %v1570 = vrcp.pop %v1554
      %v1571 = vmul.f32 %v1554, %v1570
      %v1572 = vsub.f32 1.0, %v1571
      %v1573 = vmul.f32 %v1570, %v1572
      %v1574 = vadd.f32 %v1570, %v1573
      %vm1575 = vweird.f32 %v1554
      %vm1576 = vweird.f32 %v1570
      %vm1577 = vmor %vm1575, %vm1576
      %v1578 = vsel %vm1577, %v1570, %v1574
      %v1579 = vand.u32 2147483647, %v1554
      %vm1580 = vcmp.eq.f32.partialorder %v1579, 8.507059e+37
      %v1581 = vand.u32 %v1554, 2147483648
      %v1582 = vor.u32 1.1754944e-38, %v1581
      %v1583 = vsel %vm1580, %v1582, %v1578
      %v1584 = vmul.f32 1.0, %v1583
      %v1585 = vmul.f32 %v1538, %v1569
      %v1586 = vmul.f32 %v1539, %v1584
      %v1587 = vpack.c.bf16 %v1586, %v1585
      %s1588 = scalar_lea.vmem %s866, 8
      %v1589 = vld [vmem:[%s1588] sm:$0xf]
      %v1590 = vld [vmem:[%s1588 + $0x4] sm:$0xf]
      %s1591 = scalar_lea.vmem %s870, 1
      %v1592 = vld [vmem:[%s1591] sm:$0x1]
      %v1594 = vperm.slane %v1592, 0
      %v1598 = vunpack.c.l.b16 %v1589
      %v1599 = vunpack.c.l.b16 %v1590
      %v1600 = vpack.c.b16 %v1599, %v1598
      %v1603 = vsel %vm1011, %v1587, 0
      %1605 = vmatpush.bf16.msra.mxu0 0
      %1606 = vmatpush.bf16.msra.mxu0 0
      %1607 = vmatpush.bf16.msra.mxu0 0
      %1608 = vmatpush.bf16.msra.mxu0 0
      %1609 = vmatpush.bf16.msra.mxu0 0
      %1610 = vmatpush.bf16.msra.mxu0 0
      %1611 = vmatpush.bf16.msra.mxu0 0
      %1612 = vmatpush.bf16.msra.mxu0 %v1600
      %1613 = vmatmul.bf16.gmra.mxu0 %v1603
      %v1614 = vpop.f32.mrf.mxu0
      %v1615 = vadd.f32 %v1594, %v1614
      %v1616 = vpop.f32.mrf.mxu0
      %v1617 = vadd.f32 %v1594, %v1616
      %1618 = vdwg.mxu0
      %v1619 = vld [vmem:[#allocation7] sm:$0xff]
      %v1620 = vld [vmem:[#allocation7 + $0x8] sm:$0xff]
      %v1621 = vadd.f32 %v1619, %v1615
      %v1622 = vadd.f32 %v1620, %v1617
      %1623 = vst.msk [vmem:[#allocation7] sm:$0xff] %vm1011, %v1621
      %1624 = vst.msk [vmem:[#allocation7 + $0x8] sm:$0xff] %vm1011, %v1622
      %v1625 = vld [vmem:[#allocation7] sm:$0xff]
      %v1626 = vld [vmem:[#allocation7 + $0x8] sm:$0xff]
      %v1627 = vmul.f32 %v1625, %v1002
      %v1628 = vmul.f32 %v1626, %v1007
      %v1629 = vpack.c.bf16 %v1628, %v1627
      %v1630 = vld [vmem:[%s875] sm:$0xf]
      %v1631 = vld [vmem:[%s875 + $0x4] sm:$0xf]
      %v1632 = vld [vmem:[%s878] sm:$0x1]
      %v1634 = vperm.slane %v1632, 0
      %v1638 = vunpack.c.l.b16 %v1630
      %v1639 = vunpack.c.l.b16 %v1631
      %v1640 = vpack.c.b16 %v1639, %v1638
      %v1643 = vsel %vm1011, %v1629, 0
      %1645 = vmatpush.bf16.msra.mxu0 0
      %1646 = vmatpush.bf16.msra.mxu0 0
      %1647 = vmatpush.bf16.msra.mxu0 0
      %1648 = vmatpush.bf16.msra.mxu0 0
      %1649 = vmatpush.bf16.msra.mxu0 0
      %1650 = vmatpush.bf16.msra.mxu0 0
      %1651 = vmatpush.bf16.msra.mxu0 0
      %1652 = vmatpush.bf16.msra.mxu0 %v1640
      %1653 = vmatmul.bf16.gmra.mxu0 %v1643
      %v1654 = vpop.f32.mrf.mxu0
      %v1655 = vadd.f32 %v1634, %v1654
      %v1656 = vpop.f32.mrf.mxu0
      %v1657 = vadd.f32 %v1634, %v1656
      %1658 = vdwg.mxu0
      %v1659 = vmul.f32 %v1655, %v1002
      %v1660 = vmul.f32 %v1657, %v1007
      %v1661 = vld [vmem:[%s883] sm:$0xf]
      %v1662 = vld [vmem:[%s883 + $0x4] sm:$0xf]
      %v1663 = vld [vmem:[%s886] sm:$0x1]
      %v1665 = vperm.slane %v1663, 0
      %v1669 = vunpack.c.l.b16 %v1661
      %v1670 = vunpack.c.l.b16 %v1662
      %v1671 = vpack.c.b16 %v1670, %v1669
      %1673 = vmatpush.bf16.msra.mxu0 0
      %1674 = vmatpush.bf16.msra.mxu0 0
      %1675 = vmatpush.bf16.msra.mxu0 0
      %1676 = vmatpush.bf16.msra.mxu0 0
      %1677 = vmatpush.bf16.msra.mxu0 0
      %1678 = vmatpush.bf16.msra.mxu0 0
      %1679 = vmatpush.bf16.msra.mxu0 0
      %1680 = vmatpush.bf16.msra.mxu0 %v1671
      %1681 = vmatmul.bf16.gmra.mxu0 %v1643
      %v1682 = vpop.f32.mrf.mxu0
      %v1683 = vadd.f32 %v1665, %v1682
      %v1684 = vpop.f32.mrf.mxu0
      %v1685 = vadd.f32 %v1665, %v1684
      %1686 = vdwg.mxu0
      %v1687 = vmul.f32 %v1683, %v1002
      %v1688 = vmul.f32 %v1685, %v1007
      %v1689 = vmul.f32 %v1687, 1.442695
      %v1690 = vpow.pop %v1689
      %v1691 = vmul.f32 %v1688, 1.442695
      %v1692 = vpow.pop %v1691
      %v1693 = vmul.f32 %v1690, %v1002
      %v1694 = vmul.f32 %v1692, %v1007
      %v1695 = vld [vmem:[#allocation3] sm:$0xff]
      %v1696 = vld [vmem:[#allocation3 + $0x8] sm:$0xff]
      %s1697 = scalar_lea.vmem [#allocation3], 16
      %v1698 = vld [vmem:[%s1697] sm:$0xff]
      %v1699 = vld [vmem:[%s1697 + $0x8] sm:$0xff]
      %v1700 = vld [vmem:[#allocation4] sm:$0xff]
      %v1701 = vld [vmem:[#allocation4 + $0x8] sm:$0xff]
      %s1702 = scalar_lea.vmem [#allocation4], 16
      %v1703 = vld [vmem:[%s1702] sm:$0xff]
      %v1704 = vld [vmem:[%s1702 + $0x8] sm:$0xff]
      %v1705 = vsel %vm968, %v964, %v961
      %v1706 = vsel %vm968, %v965, %v962
      %v1707 = vsel %vm968, %v1698, %v1695
      %v1708 = vsel %vm968, %v1699, %v1696
      %v1709 = vsel %vm968, %v1703, %v1700
      %v1710 = vsel %vm968, %v1704, %v1701
      %v1711 = vmul.f32 %v1705, %v1693
      %v1712 = vmul.f32 %v1706, %v1694
      %v1713 = vadd.f32 %v1659, %v1711
      %v1714 = vadd.f32 %v1660, %v1712
      %v1715 = vmul.f32 %v1707, %v1693
      %v1716 = vmul.f32 %v1708, %v1694
      %v1717 = vadd.f32 %v1659, %v1715
      %v1718 = vadd.f32 %v1660, %v1716
      %v1719 = vadd.f32 %v1709, %v1687
      %v1720 = vadd.f32 %v1710, %v1688
      %v1721 = vsel %vm968, %v961, %v1713
      %v1722 = vsel %vm968, %v962, %v1714
      %1723 = vst.msk [vmem:[#allocation2] sm:$0xff] %vm977, %v1721
      %1724 = vst.msk [vmem:[#allocation2 + $0x8] sm:$0xff] %vm977, %v1722
      %v1725 = vsel %vm968, %v1713, %v964
      %v1726 = vsel %vm968, %v1714, %v965
      %1727 = vst.msk [vmem:[%s963] sm:$0xff] %vm977, %v1725
      %1728 = vst.msk [vmem:[%s963 + $0x8] sm:$0xff] %vm977, %v1726
      %v1729 = vsel %vm968, %v1695, %v1717
      %v1730 = vsel %vm968, %v1696, %v1718
      %1731 = vst.msk [vmem:[#allocation3] sm:$0xff] %vm977, %v1729
      %1732 = vst.msk [vmem:[#allocation3 + $0x8] sm:$0xff] %vm977, %v1730
      %v1733 = vsel %vm968, %v1717, %v1698
      %v1734 = vsel %vm968, %v1718, %v1699
      %1735 = vst.msk [vmem:[%s1697] sm:$0xff] %vm977, %v1733
      %1736 = vst.msk [vmem:[%s1697 + $0x8] sm:$0xff] %vm977, %v1734
      %v1737 = vsel %vm968, %v1700, %v1719
      %v1738 = vsel %vm968, %v1701, %v1720
      %1739 = vst.msk [vmem:[#allocation4] sm:$0xff] %vm977, %v1737
      %1740 = vst.msk [vmem:[#allocation4 + $0x8] sm:$0xff] %vm977, %v1738
      %v1741 = vsel %vm968, %v1719, %v1703
      %v1742 = vsel %vm968, %v1720, %v1704
      %1743 = vst.msk [vmem:[%s1702] sm:$0xff] %vm977, %v1741
      %1744 = vst.msk [vmem:[%s1702 + $0x8] sm:$0xff] %vm977, %v1742
      %p1745 = scmp.eq.s32.totalorder %s34, 3
      // Predicated region
      $region97: #{_lambda_.1} parent=91 // pred_check
        %p1746 = pneg %p1745
      $region98: #{_lambda_.1} parent=91 // pred_check_branch
        %1748 = sbr.rel (%p1746) target = $region100
      $region99: #{_lambda_.1} parent=91 // pred_region
        %v1749 = vld [vmem:[#allocation2] sm:$0xff]
        %v1750 = vld [vmem:[#allocation2 + $0x8] sm:$0xff]
        %v1751 = vld [vmem:[%s963] sm:$0xff]
        %v1752 = vld [vmem:[%s963 + $0x8] sm:$0xff]
        %v1753 = vld [vmem:[#allocation3] sm:$0xff]
        %v1754 = vld [vmem:[#allocation3 + $0x8] sm:$0xff]
        %v1755 = vld [vmem:[%s1697] sm:$0xff]
        %v1756 = vld [vmem:[%s1697 + $0x8] sm:$0xff]
        %v1757 = vld [vmem:[#allocation4] sm:$0xff]
        %v1758 = vld [vmem:[#allocation4 + $0x8] sm:$0xff]
        %v1759 = vld [vmem:[%s1702] sm:$0xff]
        %v1760 = vld [vmem:[%s1702 + $0x8] sm:$0xff]
        %1763 = vrot.lane.b32.xlu0 %v1751, 4
        %v1764 = vpop.permute.xlu0 %1763
        %1765 = vrot.lane.b32.xlu0 %v1752, 4
        %v1766 = vpop.permute.xlu0 %1765
        %1771 = vrot.lane.b32.xlu0 %v1753, 8
        %v1772 = vpop.permute.xlu0 %1771
        %1773 = vrot.lane.b32.xlu0 %v1754, 8
        %v1774 = vpop.permute.xlu0 %1773
        %1779 = vrot.lane.b32.xlu0 %v1755, 12
        %v1780 = vpop.permute.xlu0 %1779
        %1781 = vrot.lane.b32.xlu0 %v1756, 12
        %v1782 = vpop.permute.xlu0 %1781
        %1787 = vrot.lane.b32.xlu0 %v1757, 16
        %v1788 = vpop.permute.xlu0 %1787
        %1789 = vrot.lane.b32.xlu0 %v1758, 16
        %v1790 = vpop.permute.xlu0 %1789
        %1795 = vrot.lane.b32.xlu0 %v1759, 20
        %v1796 = vpop.permute.xlu0 %1795
        %1797 = vrot.lane.b32.xlu0 %v1760, 20
        %v1798 = vpop.permute.xlu0 %1797
        %v1801 = vsel %vm977, %v1749, %v1764
        %v1802 = vsel %vm977, %v1750, %v1766
        %vm1803 = vcmask 64512
        %v1804 = vsel %vm1803, %v1801, %v1772
        %v1805 = vsel %vm1803, %v1802, %v1774
        %vm1806 = vcmask 97280
        %v1807 = vsel %vm1806, %v1804, %v1780
        %v1808 = vsel %vm1806, %v1805, %v1782
        %v1809 = vsel %vm1011, %v1807, %v1788
        %v1810 = vsel %vm1011, %v1808, %v1790
        %vm1811 = vcmask 162816
        %v1812 = vsel %vm1811, %v1809, %v1796
        %v1813 = vsel %vm1811, %v1810, %v1798
        %vm1814 = vcmask 195584
        %1815 = vst.msk [vmem:[%s891] sm:$0xff] %vm1814, %v1812
        %1816 = vst.msk [vmem:[%s891 + $0x8] sm:$0xff] %vm1814, %v1813
      $region100: #{_lambda_.1} parent=91 // pred_fallthru
        _
      %p1817 = scmp.lt.s32.totalorder %s33, 1
      %s1818 = scalar_select %p1817, %s33, 1
      %s1819 = smul.addr %s1818, 2
      %s1820 = smul.addr %s1819, 8
      %s1821 = scalar_lea.vmem %s18, %s1820
      // Predicated region
      $region101: #{_lambda_.1} parent=91 // pred_check
        %p1822 = pneg %p527
      $region102: #{_lambda_.1} parent=91 // pred_check_branch
        %1824 = sbr.rel (%p1822) target = $region104
      $region103: #{_lambda_.1} parent=91 // pred_region
        _
      $region104: #{_lambda_.1} parent=91 // pred_fallthru
        _
    $region92: #{_lambda_.1} parent=5 // pred_fallthru
      _
    %p1825 = scmp.le.s32.totalorder 2, %s24
    // Predicated region
    $region105: #{_lambda_.1} parent=5 // pred_check
      %p1826 = pneg %p1825
    $region106: #{_lambda_.1} parent=5 // pred_check_branch
      %1828 = sbr.rel (%p1826) target = $region108
    $region107: #{_lambda_.1} parent=5 // pred_region
      %s1829 = ssub.s32 %s24, 2
      // Predicated region
      $region109: #{_lambda_.1} parent=107 // pred_check
        %p1830 = pneg %p533
      $region110: #{_lambda_.1} parent=107 // pred_check_branch
        %1832 = sbr.rel (%p1830) target = $region112
      $region111: #{_lambda_.1} parent=107 // pred_region
        %p1833 = scmp.lt.s32.totalorder %s35, 1
        %s1834 = scalar_select %p1833, %s35, 1
        %s1835 = smul.addr %s1834, 2
        %s1836 = smul.addr %s1835, 8
        %s1837 = scalar_lea.vmem %s18, %s1836
      $region112: #{_lambda_.1} parent=107 // pred_fallthru
        _
    $region108: #{_lambda_.1} parent=5 // pred_fallthru
      _
  $region6: #{_lambda_.1} parent=0 // loop_footer
    %s28 = sadd.s32 1, %s24
  $region7: #{_lambda_.1} parent=0 // loop_footer_branch
    %23 = sbr.rel target = $region3
  $region8: #{_lambda_.1} parent=0 // loop_exit
    _

</llo_original>
